<compile_context>
chip_gen: v7x
topology: tpu7x:2x2x1
jax: 0.10.0
libtpu: 0.0.40
codegen_flags: <defaults>
</compile_context>

<pallas_src>
import jax
import jax.numpy as jnp
import numpy as np
from jax.experimental import pallas as pl
from jax.experimental.pallas import tpu as pltpu


_SQRT1_2 = 0.7071067811865476  # 1/sqrt(2)


def _erf_approx(x):
    """Abramowitz & Stegun 7.1.26 rational erf approximation, |error| <= 1.5e-7."""
    a1 = 0.254829592
    a2 = -0.284496736
    a3 = 1.421413741
    a4 = -1.453152027
    a5 = 1.061405429
    p = 0.3275911

    ax = jnp.abs(x)
    t = 1.0 / (1.0 + p * ax)
    poly = ((((a5 * t + a4) * t + a3) * t + a2) * t + a1) * t
    y = 1.0 - poly * jnp.exp(-ax * ax)
    return jnp.where(x >= 0.0, y, -y)


def _gelu_exact(x):
    """Exact (erf-based) GELU, matching PyTorch nn.GELU() default."""
    return 0.5 * x * (1.0 + _erf_approx(x * _SQRT1_2))


# ----------------------------------------------------------------------------
# Pallas kernel: one grid step processes a (tm, C_in) block of token rows.
# ----------------------------------------------------------------------------
def _mlp_kernel(x_ref, w1_ref, b1_ref, w2_ref, b2_ref, o_ref):
    # fc1 + bias (accumulate in f32 on the MXU)
    h = jnp.dot(x_ref[...], w1_ref[...], preferred_element_type=jnp.float32)
    h = h + b1_ref[...].astype(jnp.float32)                     # (tm, H) broadcast add

    # exact GELU (f32 elementwise math; exp goes to the EUP slot)
    h = _gelu_exact(h)

    # fc2 + bias
    o = jnp.dot(h.astype(w2_ref.dtype), w2_ref[...],
                preferred_element_type=jnp.float32)
    o = o + b2_ref[...].astype(jnp.float32)                     # (tm, C_out)

    o_ref[...] = o.astype(o_ref.dtype)


# ----------------------------------------------------------------------------
# Wrapper
# ----------------------------------------------------------------------------
def _round_up(x, m):
    return ((x + m - 1) // m) * m


def _pick_row_block(m, c_in, hidden, c_out, x_bytes, w_bytes, *,
                    max_rows=512, vmem_budget=12 << 20):
    """Largest row block (multiple of 8, <= max_rows) that fits a conservative VMEM budget."""
    # Weights / biases resident; assume the pipeline still double-buffers them.
    resident = 2 * w_bytes * (c_in * hidden + hidden + hidden * c_out + c_out)
    # Per-row cost: x tile + out tile (double-buffered) + f32 hidden activation.
    per_row = 2 * x_bytes * (c_in + c_out) + 4 * hidden
    avail = max(vmem_budget - resident, per_row * 8)
    tm = min(max_rows, avail // per_row, _round_up(m, 8))
    tm = max(8, (tm // 8) * 8)
    return int(tm)


def mlp_pallas(x, params, *, max_rows=512):
    """x: (..., C_in). Returns (..., C_out)."""
    orig_shape = x.shape
    c_in = orig_shape[-1]
    x2 = x.reshape(-1, c_in)
    m = x2.shape[0]

    w1 = params["w1"]            # (C_in, H)
    b1 = params["b1"]            # (H,)
    w2 = params["w2"]            # (H, C_out)
    b2 = params["b2"]            # (C_out,)
    hidden = w1.shape[1]
    c_out = w2.shape[1]

    x_bytes = jnp.dtype(x.dtype).itemsize
    w_bytes = jnp.dtype(w1.dtype).itemsize

    tm = _pick_row_block(m, c_in, hidden, c_out, x_bytes, w_bytes, max_rows=max_rows)
    # If everything fits in one block but there is enough work, split into two blocks so
    # the "parallel" grid axis can be sharded across both TensorCores (v7x megacore).
    if pl.cdiv(m, tm) == 1 and m >= 16:
        tm = _round_up((m + 1) // 2, 8)

    m_pad = pl.cdiv(m, tm) * tm
    if m_pad != m:
        x2 = jnp.pad(x2, ((0, m_pad - m), (0, 0)))

    grid = (m_pad // tm,)

    cost = pl.CostEstimate(
        flops=2 * m_pad * (c_in * hidden + hidden * c_out),
        transcendentals=m_pad * hidden,                         # one exp per hidden elem
        bytes_accessed=x_bytes * (m_pad * c_in + m_pad * c_out)
                       + w_bytes * (c_in * hidden + hidden + hidden * c_out + c_out),
    )

    out = pl.pallas_call(
        _mlp_kernel,
        out_shape=jax.ShapeDtypeStruct((m_pad, c_out), x.dtype),
        grid_spec=pltpu.PrefetchScalarGridSpec(
            num_scalar_prefetch=0,
            grid=grid,
            in_specs=[
                pl.BlockSpec((tm, c_in), lambda i: (i, 0)),      # x rows (tiled)
                pl.BlockSpec((c_in, hidden), lambda i: (0, 0)),  # w1 (resident)
                pl.BlockSpec((1, hidden), lambda i: (0, 0)),     # b1 (resident)
                pl.BlockSpec((hidden, c_out), lambda i: (0, 0)), # w2 (resident)
                pl.BlockSpec((1, c_out), lambda i: (0, 0)),      # b2 (resident)
            ],
            out_specs=pl.BlockSpec((tm, c_out), lambda i: (i, 0)),
        ),
        compiler_params=pltpu.CompilerParams(
            dimension_semantics=("parallel",)),
        cost_estimate=cost,
    )(x2, w1, b1.reshape(1, hidden), w2, b2.reshape(1, c_out))

    out = out[:m]
    return out.reshape(orig_shape[:-1] + (c_out,))


# ----------------------------------------------------------------------------
# Pure-JAX reference (mirrors the PyTorch forward exactly; dropout p=0 -> identity)
# ----------------------------------------------------------------------------
def mlp_ref(x, params):
    h = x @ params["w1"] + params["b1"]
    h = jax.nn.gelu(h, approximate=False)       # nn.GELU() default = exact erf GELU
    return h @ params["w2"] + params["b2"]


# ----------------------------------------------------------------------------
# Main
# ----------------------------------------------------------------------------
if __name__ == "__main__":
    key = jax.random.PRNGKey(0)

    # Small, module-consistent shapes: tokens (B, L, C) with mlp_ratio = 4.
    batch = 2
    seq = 256                 # e.g. 16x16 spatial tokens
    in_features = 32
    hidden_features = 128
    out_features = 32

    k_x, k_w1, k_b1, k_w2, k_b2 = jax.random.split(key, 5)

    params = {
        "w1": 0.05 * jax.random.normal(k_w1, (in_features, hidden_features),
                                       dtype=jnp.float32),
        "b1": 0.01 * jax.random.normal(k_b1, (hidden_features,), dtype=jnp.float32),
        "w2": 0.05 * jax.random.normal(k_w2, (hidden_features, out_features),
                                       dtype=jnp.float32),
        "b2": 0.01 * jax.random.normal(k_b2, (out_features,), dtype=jnp.float32),
    }

    x = jax.random.normal(k_x, (batch, seq, in_features), dtype=jnp.float32)

    out = mlp_pallas(x, params)
    out = jax.block_until_ready(out)

    ref = mlp_ref(x, params)
    np.testing.assert_allclose(np.asarray(out), np.asarray(ref), rtol=2e-5, atol=2e-5)

    print("KERNEL_OK")
</pallas_src>

<mosaic_0001>
module attributes {stable_mosaic.version = 11 : i64} {
  func.func @_mlp_kernel(%arg0: i32, %arg1: memref<256x32xf32, #tpu.memory_space<vmem>>, %arg2: memref<32x128xf32, #tpu.memory_space<vmem>>, %arg3: memref<1x128xf32, #tpu.memory_space<vmem>>, %arg4: memref<128x32xf32, #tpu.memory_space<vmem>>, %arg5: memref<1x32xf32, #tpu.memory_space<vmem>>, %arg6: memref<256x32xf32, #tpu.memory_space<vmem>>) attributes {dimension_semantics = [#tpu.dimension_semantics<parallel>], iteration_bounds = array<i64: 2>, scalar_prefetch = 0 : i64, scratch_operands = 0 : i64, tpu.core_type = #tpu.core_type<tc>, window_params = [{transform_indices = @transform_0, window_bounds = array<i64: 256, 32>}, {pipeline_mode = #tpu.pipeline_mode<synchronous>, transform_indices = @transform_1, window_bounds = array<i64: 32, 128>}, {pipeline_mode = #tpu.pipeline_mode<synchronous>, transform_indices = @transform_2, window_bounds = array<i64: 1, 128>}, {pipeline_mode = #tpu.pipeline_mode<synchronous>, transform_indices = @transform_3, window_bounds = array<i64: 128, 32>}, {pipeline_mode = #tpu.pipeline_mode<synchronous>, transform_indices = @transform_4, window_bounds = array<i64: 1, 32>}, {transform_indices = @transform_5, window_bounds = array<i64: 256, 32>}]} {
    %c0 = arith.constant 0 : index
    %c0_0 = arith.constant 0 : index
    %0 = vector.load %arg1[%c0, %c0_0] : memref<256x32xf32, #tpu.memory_space<vmem>>, vector<256x32xf32>
    %c0_1 = arith.constant 0 : index
    %c0_2 = arith.constant 0 : index
    %1 = vector.load %arg2[%c0_1, %c0_2] : memref<32x128xf32, #tpu.memory_space<vmem>>, vector<32x128xf32>
    %cst = arith.constant dense<0.000000e+00> : vector<256x128xf32>
    %2 = tpu.matmul %0, %1, %cst {dimension_numbers = #tpu.dot_dimension_numbers<[1], [0], [0], [1], [0, 0, 1, 1], [], []>} : vector<256x32xf32>, vector<32x128xf32>, vector<256x128xf32> -> vector<256x128xf32>
    %c0_3 = arith.constant 0 : index
    %c0_4 = arith.constant 0 : index
    %3 = vector.load %arg3[%c0_3, %c0_4] : memref<1x128xf32, #tpu.memory_space<vmem>>, vector<1x128xf32>
    %4 = vector.broadcast %3 : vector<1x128xf32> to vector<256x128xf32>
    %5 = arith.addf %2, %4 : vector<256x128xf32>
    %cst_5 = arith.constant 5.000000e-01 : f32
    %6 = vector.broadcast %cst_5 : f32 to vector<256x128xf32>
    %7 = arith.mulf %6, %5 : vector<256x128xf32>
    %cst_6 = arith.constant 0.707106769 : f32
    %8 = vector.broadcast %cst_6 : f32 to vector<256x128xf32>
    %9 = arith.mulf %5, %8 : vector<256x128xf32>
    %10 = math.absf %9 : vector<256x128xf32>
    %cst_7 = arith.constant 0.327591091 : f32
    %11 = vector.broadcast %cst_7 : f32 to vector<256x128xf32>
    %12 = arith.mulf %11, %10 : vector<256x128xf32>
    %cst_8 = arith.constant 1.000000e+00 : f32
    %13 = vector.broadcast %cst_8 : f32 to vector<256x128xf32>
    %14 = arith.addf %13, %12 : vector<256x128xf32>
    %cst_9 = arith.constant 1.000000e+00 : f32
    %15 = vector.broadcast %cst_9 : f32 to vector<256x128xf32>
    %16 = arith.divf %15, %14 : vector<256x128xf32>
    %cst_10 = arith.constant 1.06140542 : f32
    %17 = vector.broadcast %cst_10 : f32 to vector<256x128xf32>
    %18 = arith.mulf %17, %16 : vector<256x128xf32>
    %cst_11 = arith.constant -1.45315206 : f32
    %19 = vector.broadcast %cst_11 : f32 to vector<256x128xf32>
    %20 = arith.addf %18, %19 : vector<256x128xf32>
    %21 = arith.mulf %20, %16 : vector<256x128xf32>
    %cst_12 = arith.constant 1.42141378 : f32
    %22 = vector.broadcast %cst_12 : f32 to vector<256x128xf32>
    %23 = arith.addf %21, %22 : vector<256x128xf32>
    %24 = arith.mulf %23, %16 : vector<256x128xf32>
    %cst_13 = arith.constant -0.284496725 : f32
    %25 = vector.broadcast %cst_13 : f32 to vector<256x128xf32>
    %26 = arith.addf %24, %25 : vector<256x128xf32>
    %27 = arith.mulf %26, %16 : vector<256x128xf32>
    %cst_14 = arith.constant 0.254829586 : f32
    %28 = vector.broadcast %cst_14 : f32 to vector<256x128xf32>
    %29 = arith.addf %27, %28 : vector<256x128xf32>
    %30 = arith.mulf %29, %16 : vector<256x128xf32>
    %cst_15 = arith.constant 0.000000e+00 : f32
    %31 = vector.broadcast %cst_15 : f32 to vector<256x128xf32>
    %32 = arith.subf %31, %10 : vector<256x128xf32>
    %33 = arith.mulf %32, %10 : vector<256x128xf32>
    %34 = math.exp %33 : vector<256x128xf32>
    %35 = arith.mulf %30, %34 : vector<256x128xf32>
    %cst_16 = arith.constant 1.000000e+00 : f32
    %36 = vector.broadcast %cst_16 : f32 to vector<256x128xf32>
    %37 = arith.subf %36, %35 : vector<256x128xf32>
    %cst_17 = arith.constant 0.000000e+00 : f32
    %38 = vector.broadcast %cst_17 : f32 to vector<256x128xf32>
    %39 = arith.cmpf oge, %9, %38 : vector<256x128xf32>
    %cst_18 = arith.constant 0.000000e+00 : f32
    %40 = vector.broadcast %cst_18 : f32 to vector<256x128xf32>
    %41 = arith.subf %40, %37 : vector<256x128xf32>
    %42 = arith.select %39, %37, %41 : vector<256x128xi1>, vector<256x128xf32>
    %cst_19 = arith.constant 1.000000e+00 : f32
    %43 = vector.broadcast %cst_19 : f32 to vector<256x128xf32>
    %44 = arith.addf %43, %42 : vector<256x128xf32>
    %45 = arith.mulf %7, %44 : vector<256x128xf32>
    %c0_20 = arith.constant 0 : index
    %c0_21 = arith.constant 0 : index
    %46 = vector.load %arg4[%c0_20, %c0_21] : memref<128x32xf32, #tpu.memory_space<vmem>>, vector<128x32xf32>
    %cst_22 = arith.constant dense<0.000000e+00> : vector<256x32xf32>
    %47 = tpu.matmul %45, %46, %cst_22 {dimension_numbers = #tpu.dot_dimension_numbers<[1], [0], [0], [1], [0, 0, 1, 1], [], []>} : vector<256x128xf32>, vector<128x32xf32>, vector<256x32xf32> -> vector<256x32xf32>
    %c0_23 = arith.constant 0 : index
    %c0_24 = arith.constant 0 : index
    %48 = vector.load %arg5[%c0_23, %c0_24] : memref<1x32xf32, #tpu.memory_space<vmem>>, vector<1x32xf32>
    %49 = vector.broadcast %48 : vector<1x32xf32> to vector<256x32xf32>
    %50 = arith.addf %47, %49 : vector<256x32xf32>
    %c0_25 = arith.constant 0 : index
    %c0_26 = arith.constant 0 : index
    %51 = vector.load %arg6[%c0_25, %c0_26] : memref<256x32xf32, #tpu.memory_space<vmem>>, vector<256x32xf32>
    tpu.vector_store %arg6[%c0_25, %c0_26], %50 {strides = array<i32>} : memref<256x32xf32, #tpu.memory_space<vmem>>, vector<256x32xf32>,
    return
  }
  func.func @transform_0(%arg0: i32) -> (i32, i32) {
    %c0_i32 = arith.constant 0 : i32
    %c0_i32_0 = arith.constant 0 : i32
    return %arg0, %c0_i32 : i32, i32
  }
  func.func @transform_1(%arg0: i32) -> (i32, i32) {
    %c0_i32 = arith.constant 0 : i32
    %c0_i32_0 = arith.constant 0 : i32
    %c0_i32_1 = arith.constant 0 : i32
    return %c0_i32, %c0_i32_0 : i32, i32
  }
  func.func @transform_2(%arg0: i32) -> (i32, i32) {
    %c0_i32 = arith.constant 0 : i32
    %c0_i32_0 = arith.constant 0 : i32
    %c0_i32_1 = arith.constant 0 : i32
    return %c0_i32, %c0_i32_0 : i32, i32
  }
  func.func @transform_3(%arg0: i32) -> (i32, i32) {
    %c0_i32 = arith.constant 0 : i32
    %c0_i32_0 = arith.constant 0 : i32
    %c0_i32_1 = arith.constant 0 : i32
    return %c0_i32, %c0_i32_0 : i32, i32
  }
  func.func @transform_4(%arg0: i32) -> (i32, i32) {
    %c0_i32 = arith.constant 0 : i32
    %c0_i32_0 = arith.constant 0 : i32
    %c0_i32_1 = arith.constant 0 : i32
    return %c0_i32, %c0_i32_0 : i32, i32
  }
  func.func @transform_5(%arg0: i32) -> (i32, i32) {
    %c0_i32 = arith.constant 0 : i32
    %c0_i32_0 = arith.constant 0 : i32
    return %arg0, %c0_i32 : i32, i32
  }
}

</mosaic_0001>

<llo_original>
// kernel: tpu_custom_call.1
$region0: #{tpu_custom_call.1}
  #allocation0 [shape = 'u32[]', space=smem, size = 0x4, offset = 0x4, fixed_abs, tag = 'smem constant byte address 0x4 - core index']
  #allocation1 [shape = 'u32[144,128]{1,0:T(1,128)}', space=vmem, size = 0x12000, scoped, tag = 'internal scratch']
  %s0 = inlined_call_operand.vmem [shape: f32[512,32], index: 0, kind: input, shape index: {}]
  %s1 = inlined_call_operand.vmem [shape: f32[32,128], index: 1, kind: input, shape index: {}]
  %s2 = inlined_call_operand.vmem [shape: f32[1,128], index: 2, kind: input, shape index: {}]
  %s3 = inlined_call_operand.vmem [shape: f32[128,32], index: 3, kind: input, shape index: {}]
  %s4 = inlined_call_operand.vmem [shape: f32[1,32], index: 4, kind: input, shape index: {}]
  %s5 = inlined_call_operand.vmem [shape: f32[512,32], index: 5, kind: output, shape index: {}]
  %s6 = sld [smem:[#allocation0]]
  $region53: #{tpu_custom_call.1} parent=0
    _
  %s8 = ssub.s32 1, %s6
  %s9 = scalar_select 0, %s8, %s6
  loop: start=0, step=1, limit=4
  $region2: #{tpu_custom_call.1} parent=0 // loop_pre_header
    _
  $region3: #{tpu_custom_call.1} parent=0 // loop_header
    %s11 = sphi 0, %s15
    %p12 = scmp.ge.s32.totalorder %s11, 4
    %s21 = sphi 0, %s23
    %s24 = sphi 0, %s21
    %s25 = sphi 0, %s24
    %s41 = sphi 0, %s25
    %s45 = sphi 0, %s45
    %s47 = sphi 0, %s45
    %s48 = sphi 0, %s47
    %s62 = sphi 0, %s48
    %s66 = sphi 0, %s66
    %s68 = sphi 0, %s66
    %s69 = sphi 0, %s68
    %s83 = sphi 0, %s69
    %s87 = sphi 0, %s87
    %s89 = sphi 0, %s87
    %s90 = sphi 0, %s89
    %s104 = sphi 0, %s90
    %s108 = sphi 0, %s108
    %s110 = sphi 0, %s108
    %s111 = sphi 0, %s110
    %s125 = sphi 0, %s111
    %s131 = sphi 0, %s133
    %s134 = sphi 0, %s131
    %s135 = sphi 0, %s134
    %s151 = sphi 0, %s135
  $region4: #{tpu_custom_call.1} parent=0 // loop_header_branch
    %14 = sbr.rel (%p12) target = $region8
  $region5: #{tpu_custom_call.1} parent=0 // loop_body
    %s16 = ssub.s32 %s11, 1
    %s17 = ssub.s32 %s11, 2
    %s18 = sadd.s32 %s11, 1
    %s19 = ssub.s32 %s11, %s18
    %p20 = scmp.eq.s32.totalorder %s19, 0
    %s22 = sadd.s32 %s21, 1
    %s23 = scalar_select %p20, %s21, %s22
    %p26 = pneg %p20
    %p27 = scmp.eq.s32.totalorder %s11, 1
    %p28 = por %p26, %p27
    %p29 = scmp.ne.s32.totalorder %s21, %s24
    %p30 = scmp.eq.s32.totalorder %s11, 0
    %p31 = por %p29, %p30
    %p32 = scmp.ne.s32.totalorder %s21, %s24
    %p33 = scmp.eq.s32.totalorder %s16, 1
    %p34 = por %p32, %p33
    %p35 = scmp.ne.s32.totalorder %s24, %s25
    %p36 = scmp.eq.s32.totalorder %s16, 0
    %p37 = por %p35, %p36
    %p38 = scmp.ne.s32.totalorder %s24, %s25
    %p39 = scmp.eq.s32.totalorder %s17, 1
    %p40 = por %p38, %p39
    %p42 = scmp.ne.s32.totalorder %s25, %s41
    %p43 = scmp.eq.s32.totalorder %s17, 0
    %p44 = por %p42, %p43
    %s46 = sadd.s32 %s45, 1
    %p49 = scmp.eq.s32.totalorder %s11, 1
    %p50 = scmp.ne.s32.totalorder %s45, %s47
    %p51 = scmp.eq.s32.totalorder %s11, 0
    %p52 = por %p50, %p51
    %p53 = scmp.ne.s32.totalorder %s45, %s47
    %p54 = scmp.eq.s32.totalorder %s16, 1
    %p55 = por %p53, %p54
    %p56 = scmp.ne.s32.totalorder %s47, %s48
    %p57 = scmp.eq.s32.totalorder %s16, 0
    %p58 = por %p56, %p57
    %p59 = scmp.ne.s32.totalorder %s47, %s48
    %p60 = scmp.eq.s32.totalorder %s17, 1
    %p61 = por %p59, %p60
    %p63 = scmp.ne.s32.totalorder %s48, %s62
    %p64 = scmp.eq.s32.totalorder %s17, 0
    %p65 = por %p63, %p64
    %s67 = sadd.s32 %s66, 1
    %p70 = scmp.eq.s32.totalorder %s11, 1
    %p71 = scmp.ne.s32.totalorder %s66, %s68
    %p72 = scmp.eq.s32.totalorder %s11, 0
    %p73 = por %p71, %p72
    %p74 = scmp.ne.s32.totalorder %s66, %s68
    %p75 = scmp.eq.s32.totalorder %s16, 1
    %p76 = por %p74, %p75
    %p77 = scmp.ne.s32.totalorder %s68, %s69
    %p78 = scmp.eq.s32.totalorder %s16, 0
    %p79 = por %p77, %p78
    %p80 = scmp.ne.s32.totalorder %s68, %s69
    %p81 = scmp.eq.s32.totalorder %s17, 1
    %p82 = por %p80, %p81
    %p84 = scmp.ne.s32.totalorder %s69, %s83
    %p85 = scmp.eq.s32.totalorder %s17, 0
    %p86 = por %p84, %p85
    %s88 = sadd.s32 %s87, 1
    %p91 = scmp.eq.s32.totalorder %s11, 1
    %p92 = scmp.ne.s32.totalorder %s87, %s89
    %p93 = scmp.eq.s32.totalorder %s11, 0
    %p94 = por %p92, %p93
    %p95 = scmp.ne.s32.totalorder %s87, %s89
    %p96 = scmp.eq.s32.totalorder %s16, 1
    %p97 = por %p95, %p96
    %p98 = scmp.ne.s32.totalorder %s89, %s90
    %p99 = scmp.eq.s32.totalorder %s16, 0
    %p100 = por %p98, %p99
    %p101 = scmp.ne.s32.totalorder %s89, %s90
    %p102 = scmp.eq.s32.totalorder %s17, 1
    %p103 = por %p101, %p102
    %p105 = scmp.ne.s32.totalorder %s90, %s104
    %p106 = scmp.eq.s32.totalorder %s17, 0
    %p107 = por %p105, %p106
    %s109 = sadd.s32 %s108, 1
    %p112 = scmp.eq.s32.totalorder %s11, 1
    %p113 = scmp.ne.s32.totalorder %s108, %s110
    %p114 = scmp.eq.s32.totalorder %s11, 0
    %p115 = por %p113, %p114
    %p116 = scmp.ne.s32.totalorder %s108, %s110
    %p117 = scmp.eq.s32.totalorder %s16, 1
    %p118 = por %p116, %p117
    %p119 = scmp.ne.s32.totalorder %s110, %s111
    %p120 = scmp.eq.s32.totalorder %s16, 0
    %p121 = por %p119, %p120
    %p122 = scmp.ne.s32.totalorder %s110, %s111
    %p123 = scmp.eq.s32.totalorder %s17, 1
    %p124 = por %p122, %p123
    %p126 = scmp.ne.s32.totalorder %s111, %s125
    %p127 = scmp.eq.s32.totalorder %s17, 0
    %p128 = por %p126, %p127
    %s129 = ssub.s32 %s11, %s18
    %p130 = scmp.eq.s32.totalorder %s129, 0
    %s132 = sadd.s32 %s131, 1
    %s133 = scalar_select %p130, %s131, %s132
    %p136 = pneg %p130
    %p137 = scmp.eq.s32.totalorder %s11, 1
    %p138 = por %p136, %p137
    %p139 = scmp.ne.s32.totalorder %s131, %s134
    %p140 = scmp.eq.s32.totalorder %s11, 0
    %p141 = por %p139, %p140
    %p142 = scmp.ne.s32.totalorder %s131, %s134
    %p143 = scmp.eq.s32.totalorder %s16, 1
    %p144 = por %p142, %p143
    %p145 = scmp.ne.s32.totalorder %s134, %s135
    %p146 = scmp.eq.s32.totalorder %s16, 0
    %p147 = por %p145, %p146
    %p148 = scmp.ne.s32.totalorder %s134, %s135
    %p149 = scmp.eq.s32.totalorder %s17, 1
    %p150 = por %p148, %p149
    %p152 = scmp.ne.s32.totalorder %s135, %s151
    %p153 = scmp.eq.s32.totalorder %s17, 0
    %p154 = por %p152, %p153
    %p155 = scmp.le.s32.totalorder 1, %s11
    %p156 = scmp.lt.s32.totalorder %s11, 3
    %p157 = pnand %p155, %p156
    %p158 = pneg %p157
    // Predicated region
    $region9: #{tpu_custom_call.1} parent=5 // pred_check
      _
    $region10: #{tpu_custom_call.1} parent=5 // pred_check_branch
      %160 = sbr.rel (%p157) target = $region12
    $region11: #{tpu_custom_call.1} parent=5 // pred_region
      %s161 = ssub.s32 %s11, 1
      // Predicated region
      $region13: #{tpu_custom_call.1} parent=11 // pred_check
        %p162 = pneg %p58
      $region14: #{tpu_custom_call.1} parent=11 // pred_check_branch
        %164 = sbr.rel (%p162) target = $region16
      $region15: #{tpu_custom_call.1} parent=11 // pred_region
        _
      $region16: #{tpu_custom_call.1} parent=11 // pred_fallthru
        _
      // Predicated region
      $region17: #{tpu_custom_call.1} parent=11 // pred_check
        %p165 = pneg %p79
      $region18: #{tpu_custom_call.1} parent=11 // pred_check_branch
        %167 = sbr.rel (%p165) target = $region20
      $region19: #{tpu_custom_call.1} parent=11 // pred_region
        _
      $region20: #{tpu_custom_call.1} parent=11 // pred_fallthru
        _
      // Predicated region
      $region21: #{tpu_custom_call.1} parent=11 // pred_check
        %p168 = pneg %p100
      $region22: #{tpu_custom_call.1} parent=11 // pred_check_branch
        %170 = sbr.rel (%p168) target = $region24
      $region23: #{tpu_custom_call.1} parent=11 // pred_region
        _
      $region24: #{tpu_custom_call.1} parent=11 // pred_fallthru
        _
      // Predicated region
      $region25: #{tpu_custom_call.1} parent=11 // pred_check
        %p171 = pneg %p121
      $region26: #{tpu_custom_call.1} parent=11 // pred_check_branch
        %173 = sbr.rel (%p171) target = $region28
      $region27: #{tpu_custom_call.1} parent=11 // pred_region
        _
      $region28: #{tpu_custom_call.1} parent=11 // pred_fallthru
        _
    $region12: #{tpu_custom_call.1} parent=5 // pred_fallthru
      _
    %p174 = scmp.lt.s32.totalorder %s11, 2
    // Predicated region
    $region29: #{tpu_custom_call.1} parent=5 // pred_check
      %p175 = pneg %p174
    $region30: #{tpu_custom_call.1} parent=5 // pred_check_branch
      %177 = sbr.rel (%p175) target = $region32
    $region31: #{tpu_custom_call.1} parent=5 // pred_region
      // Predicated region
      $region33: #{tpu_custom_call.1} parent=31 // pred_check
        %p178 = pneg %p31
      $region34: #{tpu_custom_call.1} parent=31 // pred_check_branch
        %180 = sbr.rel (%p178) target = $region36
      $region35: #{tpu_custom_call.1} parent=31 // pred_region
        %s181 = smul.u32 32, %s11
        %p182 = scmp.lt.s32.totalorder %s181, 63
        %s183 = scalar_select %p182, %s181, 63
        %s184 = smul.addr %s183, 8
        %s185 = scalar_lea.vmem %s0, %s184
        %s186 = smul.u32 32, %s11
      $region36: #{tpu_custom_call.1} parent=31 // pred_fallthru
        _
    $region32: #{tpu_custom_call.1} parent=5 // pred_fallthru
      _
    %p187 = scmp.le.s32.totalorder 1, %s11
    %p188 = scmp.lt.s32.totalorder %s11, 3
    %p189 = pnand %p187, %p188
    %p190 = pneg %p189
    // Predicated region
    $region37: #{tpu_custom_call.1} parent=5 // pred_check
      _
    $region38: #{tpu_custom_call.1} parent=5 // pred_check_branch
      %192 = sbr.rel (%p189) target = $region40
    $region39: #{tpu_custom_call.1} parent=5 // pred_region
      %s193 = ssub.s32 %s11, 1
      %s194 = smul.u32 32, %s16
      %p195 = scmp.lt.s32.totalorder %s194, 63
      %s196 = scalar_select %p195, %s194, 63
      %s197 = smul.addr %s196, 8
      %s198 = scalar_lea.vmem %s0, %s197
      %p199 = pneg %p37
      %p200 = pneg %p34
      %p201 = pneg %p58
      %p202 = pneg %p55
      %p203 = pneg %p79
      %p204 = pneg %p76
      %p205 = pneg %p100
      %p206 = pneg %p97
      %p207 = pneg %p121
      %p208 = pneg %p118
      %p209 = pneg %p147
      %p210 = pneg %p144
      %s211 = smul.u32 32, %s16
      %p212 = scmp.lt.s32.totalorder %s211, 63
      %s213 = scalar_select %p212, %s211, 63
      %s214 = smul.addr %s213, 8
      %s215 = scalar_lea.vmem %s5, %s214
      %s216 = smul.u32 32, %s16
      %p217 = scmp.lt.s32.totalorder %s216, 63
      %s218 = scalar_select %p217, %s216, 63
      %s219 = smul.addr %s218, 8
      %s220 = scalar_lea.vmem %s0, %s219
      %s221 = smul.u32 32, %s16
      %s222 = smul.u32 32, %s16
      %p223 = scmp.lt.s32.totalorder %s222, 63
      %s224 = scalar_select %p223, %s222, 63
      %s225 = smul.addr %s224, 8
      %s226 = scalar_lea.vmem %s5, %s225
      %s227 = smul.u32 32, %s16
      %v228 = vld [vmem:[%s220] sm:$0xff]
      %v229 = vld [vmem:[%s220 + $0x8] sm:$0xff]
      %v230 = vld [vmem:[%s220 + $0x10] sm:$0xff]
      %v231 = vld [vmem:[%s220 + $0x18] sm:$0xff]
      %v232 = vld [vmem:[%s220 + $0x20] sm:$0xff]
      %v233 = vld [vmem:[%s220 + $0x28] sm:$0xff]
      %v234 = vld [vmem:[%s220 + $0x30] sm:$0xff]
      %v235 = vld [vmem:[%s220 + $0x38] sm:$0xff]
      %v236 = vld [vmem:[%s220 + $0x40] sm:$0xff]
      %v237 = vld [vmem:[%s220 + $0x48] sm:$0xff]
      %v238 = vld [vmem:[%s220 + $0x50] sm:$0xff]
      %v239 = vld [vmem:[%s220 + $0x58] sm:$0xff]
      %v240 = vld [vmem:[%s220 + $0x60] sm:$0xff]
      %v241 = vld [vmem:[%s220 + $0x68] sm:$0xff]
      %v242 = vld [vmem:[%s220 + $0x70] sm:$0xff]
      %v243 = vld [vmem:[%s220 + $0x78] sm:$0xff]
      %v244 = vld [vmem:[%s220 + $0x80] sm:$0xff]
      %v245 = vld [vmem:[%s220 + $0x88] sm:$0xff]
      %v246 = vld [vmem:[%s220 + $0x90] sm:$0xff]
      %v247 = vld [vmem:[%s220 + $0x98] sm:$0xff]
      %v248 = vld [vmem:[%s220 + $0xa0] sm:$0xff]
      %v249 = vld [vmem:[%s220 + $0xa8] sm:$0xff]
      %v250 = vld [vmem:[%s220 + $0xb0] sm:$0xff]
      %v251 = vld [vmem:[%s220 + $0xb8] sm:$0xff]
      %v252 = vld [vmem:[%s220 + $0xc0] sm:$0xff]
      %v253 = vld [vmem:[%s220 + $0xc8] sm:$0xff]
      %v254 = vld [vmem:[%s220 + $0xd0] sm:$0xff]
      %v255 = vld [vmem:[%s220 + $0xd8] sm:$0xff]
      %v256 = vld [vmem:[%s220 + $0xe0] sm:$0xff]
      %v257 = vld [vmem:[%s220 + $0xe8] sm:$0xff]
      %v258 = vld [vmem:[%s220 + $0xf0] sm:$0xff]
      %v259 = vld [vmem:[%s220 + $0xf8] sm:$0xff]
      %v260 = vld [vmem:[%s1] sm:$0xff]
      %v261 = vld [vmem:[%s1 + $0x8] sm:$0xff]
      %v262 = vld [vmem:[%s1 + $0x10] sm:$0xff]
      %v263 = vld [vmem:[%s1 + $0x18] sm:$0xff]
      %v264 = vld [vmem:[%s2] sm:$0x1]
      %v266 = vlaneseq
      %v267 = vshrl.u32 %v266, 7
      %v268 = vsub.s32 0, %v267
      %v269 = vrot.slane %v264, %v268
      %vm271 = vcmask 261120
      %v273 = vsel %vm271, %v228, 0
      %v276 = vsel %vm271, %v229, 0
      %v279 = vsel %vm271, %v230, 0
      %v282 = vsel %vm271, %v231, 0
      %v285 = vsel %vm271, %v232, 0
      %v288 = vsel %vm271, %v233, 0
      %v291 = vsel %vm271, %v234, 0
      %v294 = vsel %vm271, %v235, 0
      %v297 = vsel %vm271, %v236, 0
      %v300 = vsel %vm271, %v237, 0
      %v303 = vsel %vm271, %v238, 0
      %v306 = vsel %vm271, %v239, 0
      %v309 = vsel %vm271, %v240, 0
      %v312 = vsel %vm271, %v241, 0
      %v315 = vsel %vm271, %v242, 0
      %v318 = vsel %vm271, %v243, 0
      %v321 = vsel %vm271, %v244, 0
      %v324 = vsel %vm271, %v245, 0
      %v327 = vsel %vm271, %v246, 0
      %v330 = vsel %vm271, %v247, 0
      %v333 = vsel %vm271, %v248, 0
      %v336 = vsel %vm271, %v249, 0
      %v339 = vsel %vm271, %v250, 0
      %v342 = vsel %vm271, %v251, 0
      %v345 = vsel %vm271, %v252, 0
      %v348 = vsel %vm271, %v253, 0
      %v351 = vsel %vm271, %v254, 0
      %v354 = vsel %vm271, %v255, 0
      %v357 = vsel %vm271, %v256, 0
      %v360 = vsel %vm271, %v257, 0
      %v363 = vsel %vm271, %v258, 0
      %v366 = vsel %vm271, %v259, 0
      %368 = vmatprep.subr.mxu0 0.0
      %369 = vmatpush1.msra.mxu0 %v260
      %370 = vmatprep.subr.mxu0 0.0
      %371 = vmatpush1.msra.mxu0 %v261
      %372 = vmatprep.subr.mxu0 0.0
      %373 = vmatpush1.msra.mxu0 %v262
      %374 = vmatprep.subr.mxu0 0.0
      %375 = vmatpush1.msra.mxu0 %v263
      %376 = vmatprep.subr.mxu0 0.0
      %377 = vmatpush1.msra.mxu0 0.0
      %378 = vmatprep.subr.mxu0 0.0
      %379 = vmatpush1.msra.mxu0 0.0
      %380 = vmatprep.subr.mxu0 0.0
      %381 = vmatpush1.msra.mxu0 0.0
      %382 = vmatprep.subr.mxu0 0.0
      %383 = vmatpush1.msra.mxu0 0.0
      %384 = vmatprep.subr.mxu0 0.0
      %385 = vmatpush1.msra.mxu0 0.0
      %386 = vmatprep.subr.mxu0 0.0
      %387 = vmatpush1.msra.mxu0 0.0
      %388 = vmatprep.subr.mxu0 0.0
      %389 = vmatpush1.msra.mxu0 0.0
      %390 = vmatprep.subr.mxu0 0.0
      %391 = vmatpush1.msra.mxu0 0.0
      %392 = vmatprep.subr.mxu0 0.0
      %393 = vmatpush1.msra.mxu0 0.0
      %394 = vmatprep.subr.mxu0 0.0
      %395 = vmatpush1.msra.mxu0 0.0
      %396 = vmatprep.subr.mxu0 0.0
      %397 = vmatpush1.msra.mxu0 0.0
      %398 = vmatprep.subr.mxu0 0.0
      %399 = vmatpush1.msra.mxu0 0.0
      %400 = vmatprep.subr.mxu0 0.0
      %401 = vmatpush1.msra.mxu0 0.0
      %402 = vmatprep.subr.mxu0 0.0
      %403 = vmatpush1.msra.mxu0 0.0
      %404 = vmatprep.subr.mxu0 0.0
      %405 = vmatpush1.msra.mxu0 0.0
      %406 = vmatprep.subr.mxu0 0.0
      %407 = vmatpush1.msra.mxu0 0.0
      %408 = vmatprep.subr.mxu0 0.0
      %409 = vmatpush1.msra.mxu0 0.0
      %410 = vmatprep.subr.mxu0 0.0
      %411 = vmatpush1.msra.mxu0 0.0
      %412 = vmatprep.subr.mxu0 0.0
      %413 = vmatpush1.msra.mxu0 0.0
      %414 = vmatprep.subr.mxu0 0.0
      %415 = vmatpush1.msra.mxu0 0.0
      %416 = vmatprep.subr.mxu0 0.0
      %417 = vmatpush1.msra.mxu0 0.0
      %418 = vmatprep.subr.mxu0 0.0
      %419 = vmatpush1.msra.mxu0 0.0
      %420 = vmatprep.subr.mxu0 0.0
      %421 = vmatpush1.msra.mxu0 0.0
      %422 = vmatprep.subr.mxu0 0.0
      %423 = vmatpush1.msra.mxu0 0.0
      %424 = vmatprep.subr.mxu0 0.0
      %425 = vmatpush1.msra.mxu0 0.0
      %426 = vmatprep.subr.mxu0 0.0
      %427 = vmatpush1.msra.mxu0 0.0
      %428 = vmatprep.subr.mxu0 0.0
      %429 = vmatpush1.msra.mxu0 0.0
      %430 = vmatprep.subr.mxu0 0.0
      %431 = vmatpush1.msra.mxu0 0.0
      %432 = vmatprep.mubr.f32.mxu0 0.0
      %433 = vmatmul.mubr.f32.gmra.mrb[0].mxu0 %v273
      %v434 = vpop.f32.mrb[0].mxu0
      %v435 = vadd.f32 %v269, %v434
      %v436 = vpop.f32.mrb[0].mxu0
      %437 = vmatprep.mubr.f32.mxu0 0.0
      %438 = vmatmul.mubr.f32.gmra.mrb[0].mxu0 %v276
      %v439 = vpop.f32.mrb[0].mxu0
      %v440 = vadd.f32 %v269, %v439
      %v441 = vpop.f32.mrb[0].mxu0
      %442 = vmatprep.mubr.f32.mxu0 0.0
      %443 = vmatmul.mubr.f32.gmra.mrb[0].mxu0 %v279
      %v444 = vpop.f32.mrb[0].mxu0
      %v445 = vadd.f32 %v269, %v444
      %v446 = vpop.f32.mrb[0].mxu0
      %447 = vmatprep.mubr.f32.mxu0 0.0
      %448 = vmatmul.mubr.f32.gmra.mrb[0].mxu0 %v282
      %v449 = vpop.f32.mrb[0].mxu0
      %v450 = vadd.f32 %v269, %v449
      %v451 = vpop.f32.mrb[0].mxu0
      %452 = vmatprep.mubr.f32.mxu0 0.0
      %453 = vmatmul.mubr.f32.gmra.mrb[0].mxu0 %v285
      %v454 = vpop.f32.mrb[0].mxu0
      %v455 = vadd.f32 %v269, %v454
      %v456 = vpop.f32.mrb[0].mxu0
      %457 = vmatprep.mubr.f32.mxu0 0.0
      %458 = vmatmul.mubr.f32.gmra.mrb[0].mxu0 %v288
      %v459 = vpop.f32.mrb[0].mxu0
      %v460 = vadd.f32 %v269, %v459
      %v461 = vpop.f32.mrb[0].mxu0
      %462 = vmatprep.mubr.f32.mxu0 0.0
      %463 = vmatmul.mubr.f32.gmra.mrb[0].mxu0 %v291
      %v464 = vpop.f32.mrb[0].mxu0
      %v465 = vadd.f32 %v269, %v464
      %v466 = vpop.f32.mrb[0].mxu0
      %467 = vmatprep.mubr.f32.mxu0 0.0
      %468 = vmatmul.mubr.f32.gmra.mrb[0].mxu0 %v294
      %v469 = vpop.f32.mrb[0].mxu0
      %v470 = vadd.f32 %v269, %v469
      %v471 = vpop.f32.mrb[0].mxu0
      %472 = vmatprep.mubr.f32.mxu0 0.0
      %473 = vmatmul.mubr.f32.gmra.mrb[0].mxu0 %v297
      %v474 = vpop.f32.mrb[0].mxu0
      %v475 = vadd.f32 %v269, %v474
      %v476 = vpop.f32.mrb[0].mxu0
      %477 = vmatprep.mubr.f32.mxu0 0.0
      %478 = vmatmul.mubr.f32.gmra.mrb[0].mxu0 %v300
      %v479 = vpop.f32.mrb[0].mxu0
      %v480 = vadd.f32 %v269, %v479
      %v481 = vpop.f32.mrb[0].mxu0
      %482 = vmatprep.mubr.f32.mxu0 0.0
      %483 = vmatmul.mubr.f32.gmra.mrb[0].mxu0 %v303
      %v484 = vpop.f32.mrb[0].mxu0
      %v485 = vadd.f32 %v269, %v484
      %v486 = vpop.f32.mrb[0].mxu0
      %487 = vmatprep.mubr.f32.mxu0 0.0
      %488 = vmatmul.mubr.f32.gmra.mrb[0].mxu0 %v306
      %v489 = vpop.f32.mrb[0].mxu0
      %v490 = vadd.f32 %v269, %v489
      %v491 = vpop.f32.mrb[0].mxu0
      %492 = vmatprep.mubr.f32.mxu0 0.0
      %493 = vmatmul.mubr.f32.gmra.mrb[0].mxu0 %v309
      %v494 = vpop.f32.mrb[0].mxu0
      %v495 = vadd.f32 %v269, %v494
      %v496 = vpop.f32.mrb[0].mxu0
      %497 = vmatprep.mubr.f32.mxu0 0.0
      %498 = vmatmul.mubr.f32.gmra.mrb[0].mxu0 %v312
      %v499 = vpop.f32.mrb[0].mxu0
      %v500 = vadd.f32 %v269, %v499
      %v501 = vpop.f32.mrb[0].mxu0
      %502 = vmatprep.mubr.f32.mxu0 0.0
      %503 = vmatmul.mubr.f32.gmra.mrb[0].mxu0 %v315
      %v504 = vpop.f32.mrb[0].mxu0
      %v505 = vadd.f32 %v269, %v504
      %v506 = vpop.f32.mrb[0].mxu0
      %507 = vmatprep.mubr.f32.mxu0 0.0
      %508 = vmatmul.mubr.f32.gmra.mrb[0].mxu0 %v318
      %v509 = vpop.f32.mrb[0].mxu0
      %v510 = vadd.f32 %v269, %v509
      %v511 = vpop.f32.mrb[0].mxu0
      %512 = vmatprep.mubr.f32.mxu0 0.0
      %513 = vmatmul.mubr.f32.gmra.mrb[0].mxu0 %v321
      %v514 = vpop.f32.mrb[0].mxu0
      %v515 = vadd.f32 %v269, %v514
      %v516 = vpop.f32.mrb[0].mxu0
      %517 = vmatprep.mubr.f32.mxu0 0.0
      %518 = vmatmul.mubr.f32.gmra.mrb[0].mxu0 %v324
      %v519 = vpop.f32.mrb[0].mxu0
      %v520 = vadd.f32 %v269, %v519
      %v521 = vpop.f32.mrb[0].mxu0
      %522 = vmatprep.mubr.f32.mxu0 0.0
      %523 = vmatmul.mubr.f32.gmra.mrb[0].mxu0 %v327
      %v524 = vpop.f32.mrb[0].mxu0
      %v525 = vadd.f32 %v269, %v524
      %v526 = vpop.f32.mrb[0].mxu0
      %527 = vmatprep.mubr.f32.mxu0 0.0
      %528 = vmatmul.mubr.f32.gmra.mrb[0].mxu0 %v330
      %v529 = vpop.f32.mrb[0].mxu0
      %v530 = vadd.f32 %v269, %v529
      %v531 = vpop.f32.mrb[0].mxu0
      %532 = vmatprep.mubr.f32.mxu0 0.0
      %533 = vmatmul.mubr.f32.gmra.mrb[0].mxu0 %v333
      %v534 = vpop.f32.mrb[0].mxu0
      %v535 = vadd.f32 %v269, %v534
      %v536 = vpop.f32.mrb[0].mxu0
      %537 = vmatprep.mubr.f32.mxu0 0.0
      %538 = vmatmul.mubr.f32.gmra.mrb[0].mxu0 %v336
      %v539 = vpop.f32.mrb[0].mxu0
      %v540 = vadd.f32 %v269, %v539
      %v541 = vpop.f32.mrb[0].mxu0
      %542 = vmatprep.mubr.f32.mxu0 0.0
      %543 = vmatmul.mubr.f32.gmra.mrb[0].mxu0 %v339
      %v544 = vpop.f32.mrb[0].mxu0
      %v545 = vadd.f32 %v269, %v544
      %v546 = vpop.f32.mrb[0].mxu0
      %547 = vmatprep.mubr.f32.mxu0 0.0
      %548 = vmatmul.mubr.f32.gmra.mrb[0].mxu0 %v342
      %v549 = vpop.f32.mrb[0].mxu0
      %v550 = vadd.f32 %v269, %v549
      %v551 = vpop.f32.mrb[0].mxu0
      %552 = vmatprep.mubr.f32.mxu0 0.0
      %553 = vmatmul.mubr.f32.gmra.mrb[0].mxu0 %v345
      %v554 = vpop.f32.mrb[0].mxu0
      %v555 = vadd.f32 %v269, %v554
      %v556 = vpop.f32.mrb[0].mxu0
      %557 = vmatprep.mubr.f32.mxu0 0.0
      %558 = vmatmul.mubr.f32.gmra.mrb[0].mxu0 %v348
      %v559 = vpop.f32.mrb[0].mxu0
      %v560 = vadd.f32 %v269, %v559
      %v561 = vpop.f32.mrb[0].mxu0
      %562 = vmatprep.mubr.f32.mxu0 0.0
      %563 = vmatmul.mubr.f32.gmra.mrb[0].mxu0 %v351
      %v564 = vpop.f32.mrb[0].mxu0
      %v565 = vadd.f32 %v269, %v564
      %v566 = vpop.f32.mrb[0].mxu0
      %567 = vmatprep.mubr.f32.mxu0 0.0
      %568 = vmatmul.mubr.f32.gmra.mrb[0].mxu0 %v354
      %v569 = vpop.f32.mrb[0].mxu0
      %v570 = vadd.f32 %v269, %v569
      %v571 = vpop.f32.mrb[0].mxu0
      %572 = vmatprep.mubr.f32.mxu0 0.0
      %573 = vmatmul.mubr.f32.gmra.mrb[0].mxu0 %v357
      %v574 = vpop.f32.mrb[0].mxu0
      %v575 = vadd.f32 %v269, %v574
      %v576 = vpop.f32.mrb[0].mxu0
      %577 = vmatprep.mubr.f32.mxu0 0.0
      %578 = vmatmul.mubr.f32.gmra.mrb[0].mxu0 %v360
      %v579 = vpop.f32.mrb[0].mxu0
      %v580 = vadd.f32 %v269, %v579
      %v581 = vpop.f32.mrb[0].mxu0
      %582 = vmatprep.mubr.f32.mxu0 0.0
      %583 = vmatmul.mubr.f32.gmra.mrb[0].mxu0 %v363
      %v584 = vpop.f32.mrb[0].mxu0
      %v585 = vadd.f32 %v269, %v584
      %v586 = vpop.f32.mrb[0].mxu0
      %587 = vmatprep.mubr.f32.mxu0 0.0
      %588 = vmatmul.mubr.f32.gmra.mrb[0].mxu0 %v366
      %v589 = vpop.f32.mrb[0].mxu0
      %v590 = vadd.f32 %v269, %v589
      %v591 = vpop.f32.mrb[0].mxu0
      %592 = vdwg.mxu0
      %v593 = vmul.f32 %v435, 0.5
      %v594 = vmul.f32 %v440, 0.5
      %v595 = vmul.f32 %v445, 0.5
      %v596 = vmul.f32 %v450, 0.5
      %v597 = vmul.f32 %v455, 0.5
      %v598 = vmul.f32 %v460, 0.5
      %v599 = vmul.f32 %v465, 0.5
      %v600 = vmul.f32 %v470, 0.5
      %v601 = vmul.f32 %v475, 0.5
      %v602 = vmul.f32 %v480, 0.5
      %v603 = vmul.f32 %v485, 0.5
      %v604 = vmul.f32 %v490, 0.5
      %v605 = vmul.f32 %v495, 0.5
      %v606 = vmul.f32 %v500, 0.5
      %v607 = vmul.f32 %v505, 0.5
      %v608 = vmul.f32 %v510, 0.5
      %v609 = vmul.f32 %v515, 0.5
      %v610 = vmul.f32 %v520, 0.5
      %v611 = vmul.f32 %v525, 0.5
      %v612 = vmul.f32 %v530, 0.5
      %v613 = vmul.f32 %v535, 0.5
      %v614 = vmul.f32 %v540, 0.5
      %v615 = vmul.f32 %v545, 0.5
      %v616 = vmul.f32 %v550, 0.5
      %v617 = vmul.f32 %v555, 0.5
      %v618 = vmul.f32 %v560, 0.5
      %v619 = vmul.f32 %v565, 0.5
      %v620 = vmul.f32 %v570, 0.5
      %v621 = vmul.f32 %v575, 0.5
      %v622 = vmul.f32 %v580, 0.5
      %v623 = vmul.f32 %v585, 0.5
      %v624 = vmul.f32 %v590, 0.5
      %v625 = vmul.f32 %v435, 0.70710677
      %v626 = vmul.f32 %v440, 0.70710677
      %v627 = vmul.f32 %v445, 0.70710677
      %v628 = vmul.f32 %v450, 0.70710677
      %v629 = vmul.f32 %v455, 0.70710677
      %v630 = vmul.f32 %v460, 0.70710677
      %v631 = vmul.f32 %v465, 0.70710677
      %v632 = vmul.f32 %v470, 0.70710677
      %v633 = vmul.f32 %v475, 0.70710677
      %v634 = vmul.f32 %v480, 0.70710677
      %v635 = vmul.f32 %v485, 0.70710677
      %v636 = vmul.f32 %v490, 0.70710677
      %v637 = vmul.f32 %v495, 0.70710677
      %v638 = vmul.f32 %v500, 0.70710677
      %v639 = vmul.f32 %v505, 0.70710677
      %v640 = vmul.f32 %v510, 0.70710677
      %v641 = vmul.f32 %v515, 0.70710677
      %v642 = vmul.f32 %v520, 0.70710677
      %v643 = vmul.f32 %v525, 0.70710677
      %v644 = vmul.f32 %v530, 0.70710677
      %v645 = vmul.f32 %v535, 0.70710677
      %v646 = vmul.f32 %v540, 0.70710677
      %v647 = vmul.f32 %v545, 0.70710677
      %v648 = vmul.f32 %v550, 0.70710677
      %v649 = vmul.f32 %v555, 0.70710677
      %v650 = vmul.f32 %v560, 0.70710677
      %v651 = vmul.f32 %v565, 0.70710677
      %v652 = vmul.f32 %v570, 0.70710677
      %v653 = vmul.f32 %v575, 0.70710677
      %v654 = vmul.f32 %v580, 0.70710677
      %v655 = vmul.f32 %v585, 0.70710677
      %v656 = vmul.f32 %v590, 0.70710677
      %v657 = vand.u32 2147483647, %v625
      %v658 = vand.u32 2147483647, %v626
      %v659 = vand.u32 2147483647, %v627
      %v660 = vand.u32 2147483647, %v628
      %v661 = vand.u32 2147483647, %v629
      %v662 = vand.u32 2147483647, %v630
      %v663 = vand.u32 2147483647, %v631
      %v664 = vand.u32 2147483647, %v632
      %v665 = vand.u32 2147483647, %v633
      %v666 = vand.u32 2147483647, %v634
      %v667 = vand.u32 2147483647, %v635
      %v668 = vand.u32 2147483647, %v636
      %v669 = vand.u32 2147483647, %v637
      %v670 = vand.u32 2147483647, %v638
      %v671 = vand.u32 2147483647, %v639
      %v672 = vand.u32 2147483647, %v640
      %v673 = vand.u32 2147483647, %v641
      %v674 = vand.u32 2147483647, %v642
      %v675 = vand.u32 2147483647, %v643
      %v676 = vand.u32 2147483647, %v644
      %v677 = vand.u32 2147483647, %v645
      %v678 = vand.u32 2147483647, %v646
      %v679 = vand.u32 2147483647, %v647
      %v680 = vand.u32 2147483647, %v648
      %v681 = vand.u32 2147483647, %v649
      %v682 = vand.u32 2147483647, %v650
      %v683 = vand.u32 2147483647, %v651
      %v684 = vand.u32 2147483647, %v652
      %v685 = vand.u32 2147483647, %v653
      %v686 = vand.u32 2147483647, %v654
      %v687 = vand.u32 2147483647, %v655
      %v688 = vand.u32 2147483647, %v656
      %v689 = vmul.f32 %v657, 0.3275911
      %v690 = vmul.f32 %v658, 0.3275911
      %v691 = vmul.f32 %v659, 0.3275911
      %v692 = vmul.f32 %v660, 0.3275911
      %v693 = vmul.f32 %v661, 0.3275911
      %v694 = vmul.f32 %v662, 0.3275911
      %v695 = vmul.f32 %v663, 0.3275911
      %v696 = vmul.f32 %v664, 0.3275911
      %v697 = vmul.f32 %v665, 0.3275911
      %v698 = vmul.f32 %v666, 0.3275911
      %v699 = vmul.f32 %v667, 0.3275911
      %v700 = vmul.f32 %v668, 0.3275911
      %v701 = vmul.f32 %v669, 0.3275911
      %v702 = vmul.f32 %v670, 0.3275911
      %v703 = vmul.f32 %v671, 0.3275911
      %v704 = vmul.f32 %v672, 0.3275911
      %v705 = vmul.f32 %v673, 0.3275911
      %v706 = vmul.f32 %v674, 0.3275911
      %v707 = vmul.f32 %v675, 0.3275911
      %v708 = vmul.f32 %v676, 0.3275911
      %v709 = vmul.f32 %v677, 0.3275911
      %v710 = vmul.f32 %v678, 0.3275911
      %v711 = vmul.f32 %v679, 0.3275911
      %v712 = vmul.f32 %v680, 0.3275911
      %v713 = vmul.f32 %v681, 0.3275911
      %v714 = vmul.f32 %v682, 0.3275911
      %v715 = vmul.f32 %v683, 0.3275911
      %v716 = vmul.f32 %v684, 0.3275911
      %v717 = vmul.f32 %v685, 0.3275911
      %v718 = vmul.f32 %v686, 0.3275911
      %v719 = vmul.f32 %v687, 0.3275911
      %v720 = vmul.f32 %v688, 0.3275911
      %v721 = vadd.f32 %v689, 1.0
      %v722 = vadd.f32 %v690, 1.0
      %v723 = vadd.f32 %v691, 1.0
      %v724 = vadd.f32 %v692, 1.0
      %v725 = vadd.f32 %v693, 1.0
      %v726 = vadd.f32 %v694, 1.0
      %v727 = vadd.f32 %v695, 1.0
      %v728 = vadd.f32 %v696, 1.0
      %v729 = vadd.f32 %v697, 1.0
      %v730 = vadd.f32 %v698, 1.0
      %v731 = vadd.f32 %v699, 1.0
      %v732 = vadd.f32 %v700, 1.0
      %v733 = vadd.f32 %v701, 1.0
      %v734 = vadd.f32 %v702, 1.0
      %v735 = vadd.f32 %v703, 1.0
      %v736 = vadd.f32 %v704, 1.0
      %v737 = vadd.f32 %v705, 1.0
      %v738 = vadd.f32 %v706, 1.0
      %v739 = vadd.f32 %v707, 1.0
      %v740 = vadd.f32 %v708, 1.0
      %v741 = vadd.f32 %v709, 1.0
      %v742 = vadd.f32 %v710, 1.0
      %v743 = vadd.f32 %v711, 1.0
      %v744 = vadd.f32 %v712, 1.0
      %v745 = vadd.f32 %v713, 1.0
      %v746 = vadd.f32 %v714, 1.0
      %v747 = vadd.f32 %v715, 1.0
      %v748 = vadd.f32 %v716, 1.0
      %v749 = vadd.f32 %v717, 1.0
      %v750 = vadd.f32 %v718, 1.0
      %v751 = vadd.f32 %v719, 1.0
      %v752 = vadd.f32 %v720, 1.0
      %v753 = vrcp.pop %v721
      %v754 = vmul.f32 1.0, %v753
      %v755 = vrcp.pop %v722
      %v756 = vmul.f32 1.0, %v755
      %v757 = vrcp.pop %v723
      %v758 = vmul.f32 1.0, %v757
      %v759 = vrcp.pop %v724
      %v760 = vmul.f32 1.0, %v759
      %v761 = vrcp.pop %v725
      %v762 = vmul.f32 1.0, %v761
      %v763 = vrcp.pop %v726
      %v764 = vmul.f32 1.0, %v763
      %v765 = vrcp.pop %v727
      %v766 = vmul.f32 1.0, %v765
      %v767 = vrcp.pop %v728
      %v768 = vmul.f32 1.0, %v767
      %v769 = vrcp.pop %v729
      %v770 = vmul.f32 1.0, %v769
      %v771 = vrcp.pop %v730
      %v772 = vmul.f32 1.0, %v771
      %v773 = vrcp.pop %v731
      %v774 = vmul.f32 1.0, %v773
      %v775 = vrcp.pop %v732
      %v776 = vmul.f32 1.0, %v775
      %v777 = vrcp.pop %v733
      %v778 = vmul.f32 1.0, %v777
      %v779 = vrcp.pop %v734
      %v780 = vmul.f32 1.0, %v779
      %v781 = vrcp.pop %v735
      %v782 = vmul.f32 1.0, %v781
      %v783 = vrcp.pop %v736
      %v784 = vmul.f32 1.0, %v783
      %v785 = vrcp.pop %v737
      %v786 = vmul.f32 1.0, %v785
      %v787 = vrcp.pop %v738
      %v788 = vmul.f32 1.0, %v787
      %v789 = vrcp.pop %v739
      %v790 = vmul.f32 1.0, %v789
      %v791 = vrcp.pop %v740
      %v792 = vmul.f32 1.0, %v791
      %v793 = vrcp.pop %v741
      %v794 = vmul.f32 1.0, %v793
      %v795 = vrcp.pop %v742
      %v796 = vmul.f32 1.0, %v795
      %v797 = vrcp.pop %v743
      %v798 = vmul.f32 1.0, %v797
      %v799 = vrcp.pop %v744
      %v800 = vmul.f32 1.0, %v799
      %v801 = vrcp.pop %v745
      %v802 = vmul.f32 1.0, %v801
      %v803 = vrcp.pop %v746
      %v804 = vmul.f32 1.0, %v803
      %v805 = vrcp.pop %v747
      %v806 = vmul.f32 1.0, %v805
      %v807 = vrcp.pop %v748
      %v808 = vmul.f32 1.0, %v807
      %v809 = vrcp.pop %v749
      %v810 = vmul.f32 1.0, %v809
      %v811 = vrcp.pop %v750
      %v812 = vmul.f32 1.0, %v811
      %v813 = vrcp.pop %v751
      %v814 = vmul.f32 1.0, %v813
      %v815 = vrcp.pop %v752
      %v816 = vmul.f32 1.0, %v815
      %v817 = vmul.f32 %v754, 1.0614054
      %v818 = vmul.f32 %v756, 1.0614054
      %v819 = vmul.f32 %v758, 1.0614054
      %v820 = vmul.f32 %v760, 1.0614054
      %v821 = vmul.f32 %v762, 1.0614054
      %v822 = vmul.f32 %v764, 1.0614054
      %v823 = vmul.f32 %v766, 1.0614054
      %v824 = vmul.f32 %v768, 1.0614054
      %v825 = vmul.f32 %v770, 1.0614054
      %v826 = vmul.f32 %v772, 1.0614054
      %v827 = vmul.f32 %v774, 1.0614054
      %v828 = vmul.f32 %v776, 1.0614054
      %v829 = vmul.f32 %v778, 1.0614054
      %v830 = vmul.f32 %v780, 1.0614054
      %v831 = vmul.f32 %v782, 1.0614054
      %v832 = vmul.f32 %v784, 1.0614054
      %v833 = vmul.f32 %v786, 1.0614054
      %v834 = vmul.f32 %v788, 1.0614054
      %v835 = vmul.f32 %v790, 1.0614054
      %v836 = vmul.f32 %v792, 1.0614054
      %v837 = vmul.f32 %v794, 1.0614054
      %v838 = vmul.f32 %v796, 1.0614054
      %v839 = vmul.f32 %v798, 1.0614054
      %v840 = vmul.f32 %v800, 1.0614054
      %v841 = vmul.f32 %v802, 1.0614054
      %v842 = vmul.f32 %v804, 1.0614054
      %v843 = vmul.f32 %v806, 1.0614054
      %v844 = vmul.f32 %v808, 1.0614054
      %v845 = vmul.f32 %v810, 1.0614054
      %v846 = vmul.f32 %v812, 1.0614054
      %v847 = vmul.f32 %v814, 1.0614054
      %v848 = vmul.f32 %v816, 1.0614054
      %v849 = vadd.f32 %v817, -1.4531521
      %v850 = vadd.f32 %v818, -1.4531521
      %v851 = vadd.f32 %v819, -1.4531521
      %v852 = vadd.f32 %v820, -1.4531521
      %v853 = vadd.f32 %v821, -1.4531521
      %v854 = vadd.f32 %v822, -1.4531521
      %v855 = vadd.f32 %v823, -1.4531521
      %v856 = vadd.f32 %v824, -1.4531521
      %v857 = vadd.f32 %v825, -1.4531521
      %v858 = vadd.f32 %v826, -1.4531521
      %v859 = vadd.f32 %v827, -1.4531521
      %v860 = vadd.f32 %v828, -1.4531521
      %v861 = vadd.f32 %v829, -1.4531521
      %v862 = vadd.f32 %v830, -1.4531521
      %v863 = vadd.f32 %v831, -1.4531521
      %v864 = vadd.f32 %v832, -1.4531521
      %v865 = vadd.f32 %v833, -1.4531521
      %v866 = vadd.f32 %v834, -1.4531521
      %v867 = vadd.f32 %v835, -1.4531521
      %v868 = vadd.f32 %v836, -1.4531521
      %v869 = vadd.f32 %v837, -1.4531521
      %v870 = vadd.f32 %v838, -1.4531521
      %v871 = vadd.f32 %v839, -1.4531521
      %v872 = vadd.f32 %v840, -1.4531521
      %v873 = vadd.f32 %v841, -1.4531521
      %v874 = vadd.f32 %v842, -1.4531521
      %v875 = vadd.f32 %v843, -1.4531521
      %v876 = vadd.f32 %v844, -1.4531521
      %v877 = vadd.f32 %v845, -1.4531521
      %v878 = vadd.f32 %v846, -1.4531521
      %v879 = vadd.f32 %v847, -1.4531521
      %v880 = vadd.f32 %v848, -1.4531521
      %v881 = vmul.f32 %v849, %v754
      %v882 = vmul.f32 %v850, %v756
      %v883 = vmul.f32 %v851, %v758
      %v884 = vmul.f32 %v852, %v760
      %v885 = vmul.f32 %v853, %v762
      %v886 = vmul.f32 %v854, %v764
      %v887 = vmul.f32 %v855, %v766
      %v888 = vmul.f32 %v856, %v768
      %v889 = vmul.f32 %v857, %v770
      %v890 = vmul.f32 %v858, %v772
      %v891 = vmul.f32 %v859, %v774
      %v892 = vmul.f32 %v860, %v776
      %v893 = vmul.f32 %v861, %v778
      %v894 = vmul.f32 %v862, %v780
      %v895 = vmul.f32 %v863, %v782
      %v896 = vmul.f32 %v864, %v784
      %v897 = vmul.f32 %v865, %v786
      %v898 = vmul.f32 %v866, %v788
      %v899 = vmul.f32 %v867, %v790
      %v900 = vmul.f32 %v868, %v792
      %v901 = vmul.f32 %v869, %v794
      %v902 = vmul.f32 %v870, %v796
      %v903 = vmul.f32 %v871, %v798
      %v904 = vmul.f32 %v872, %v800
      %v905 = vmul.f32 %v873, %v802
      %v906 = vmul.f32 %v874, %v804
      %v907 = vmul.f32 %v875, %v806
      %v908 = vmul.f32 %v876, %v808
      %v909 = vmul.f32 %v877, %v810
      %v910 = vmul.f32 %v878, %v812
      %v911 = vmul.f32 %v879, %v814
      %v912 = vmul.f32 %v880, %v816
      %v913 = vadd.f32 %v881, 1.4214138
      %v914 = vadd.f32 %v882, 1.4214138
      %v915 = vadd.f32 %v883, 1.4214138
      %v916 = vadd.f32 %v884, 1.4214138
      %v917 = vadd.f32 %v885, 1.4214138
      %v918 = vadd.f32 %v886, 1.4214138
      %v919 = vadd.f32 %v887, 1.4214138
      %v920 = vadd.f32 %v888, 1.4214138
      %v921 = vadd.f32 %v889, 1.4214138
      %v922 = vadd.f32 %v890, 1.4214138
      %v923 = vadd.f32 %v891, 1.4214138
      %v924 = vadd.f32 %v892, 1.4214138
      %v925 = vadd.f32 %v893, 1.4214138
      %v926 = vadd.f32 %v894, 1.4214138
      %v927 = vadd.f32 %v895, 1.4214138
      %v928 = vadd.f32 %v896, 1.4214138
      %v929 = vadd.f32 %v897, 1.4214138
      %v930 = vadd.f32 %v898, 1.4214138
      %v931 = vadd.f32 %v899, 1.4214138
      %v932 = vadd.f32 %v900, 1.4214138
      %v933 = vadd.f32 %v901, 1.4214138
      %v934 = vadd.f32 %v902, 1.4214138
      %v935 = vadd.f32 %v903, 1.4214138
      %v936 = vadd.f32 %v904, 1.4214138
      %v937 = vadd.f32 %v905, 1.4214138
      %v938 = vadd.f32 %v906, 1.4214138
      %v939 = vadd.f32 %v907, 1.4214138
      %v940 = vadd.f32 %v908, 1.4214138
      %v941 = vadd.f32 %v909, 1.4214138
      %v942 = vadd.f32 %v910, 1.4214138
      %v943 = vadd.f32 %v911, 1.4214138
      %v944 = vadd.f32 %v912, 1.4214138
      %v945 = vmul.f32 %v913, %v754
      %v946 = vmul.f32 %v914, %v756
      %v947 = vmul.f32 %v915, %v758
      %v948 = vmul.f32 %v916, %v760
      %v949 = vmul.f32 %v917, %v762
      %v950 = vmul.f32 %v918, %v764
      %v951 = vmul.f32 %v919, %v766
      %v952 = vmul.f32 %v920, %v768
      %v953 = vmul.f32 %v921, %v770
      %v954 = vmul.f32 %v922, %v772
      %v955 = vmul.f32 %v923, %v774
      %v956 = vmul.f32 %v924, %v776
      %v957 = vmul.f32 %v925, %v778
      %v958 = vmul.f32 %v926, %v780
      %v959 = vmul.f32 %v927, %v782
      %v960 = vmul.f32 %v928, %v784
      %v961 = vmul.f32 %v929, %v786
      %v962 = vmul.f32 %v930, %v788
      %v963 = vmul.f32 %v931, %v790
      %v964 = vmul.f32 %v932, %v792
      %v965 = vmul.f32 %v933, %v794
      %v966 = vmul.f32 %v934, %v796
      %v967 = vmul.f32 %v935, %v798
      %v968 = vmul.f32 %v936, %v800
      %v969 = vmul.f32 %v937, %v802
      %v970 = vmul.f32 %v938, %v804
      %v971 = vmul.f32 %v939, %v806
      %v972 = vmul.f32 %v940, %v808
      %v973 = vmul.f32 %v941, %v810
      %v974 = vmul.f32 %v942, %v812
      %v975 = vmul.f32 %v943, %v814
      %v976 = vmul.f32 %v944, %v816
      %v977 = vadd.f32 %v945, -0.28449672
      %v978 = vadd.f32 %v946, -0.28449672
      %v979 = vadd.f32 %v947, -0.28449672
      %v980 = vadd.f32 %v948, -0.28449672
      %v981 = vadd.f32 %v949, -0.28449672
      %v982 = vadd.f32 %v950, -0.28449672
      %v983 = vadd.f32 %v951, -0.28449672
      %v984 = vadd.f32 %v952, -0.28449672
      %v985 = vadd.f32 %v953, -0.28449672
      %v986 = vadd.f32 %v954, -0.28449672
      %v987 = vadd.f32 %v955, -0.28449672
      %v988 = vadd.f32 %v956, -0.28449672
      %v989 = vadd.f32 %v957, -0.28449672
      %v990 = vadd.f32 %v958, -0.28449672
      %v991 = vadd.f32 %v959, -0.28449672
      %v992 = vadd.f32 %v960, -0.28449672
      %v993 = vadd.f32 %v961, -0.28449672
      %v994 = vadd.f32 %v962, -0.28449672
      %v995 = vadd.f32 %v963, -0.28449672
      %v996 = vadd.f32 %v964, -0.28449672
      %v997 = vadd.f32 %v965, -0.28449672
      %v998 = vadd.f32 %v966, -0.28449672
      %v999 = vadd.f32 %v967, -0.28449672
      %v1000 = vadd.f32 %v968, -0.28449672
      %v1001 = vadd.f32 %v969, -0.28449672
      %v1002 = vadd.f32 %v970, -0.28449672
      %v1003 = vadd.f32 %v971, -0.28449672
      %v1004 = vadd.f32 %v972, -0.28449672
      %v1005 = vadd.f32 %v973, -0.28449672
      %v1006 = vadd.f32 %v974, -0.28449672
      %v1007 = vadd.f32 %v975, -0.28449672
      %v1008 = vadd.f32 %v976, -0.28449672
      %v1009 = vmul.f32 %v977, %v754
      %v1010 = vmul.f32 %v978, %v756
      %v1011 = vmul.f32 %v979, %v758
      %v1012 = vmul.f32 %v980, %v760
      %v1013 = vmul.f32 %v981, %v762
      %v1014 = vmul.f32 %v982, %v764
      %v1015 = vmul.f32 %v983, %v766
      %v1016 = vmul.f32 %v984, %v768
      %v1017 = vmul.f32 %v985, %v770
      %v1018 = vmul.f32 %v986, %v772
      %v1019 = vmul.f32 %v987, %v774
      %v1020 = vmul.f32 %v988, %v776
      %v1021 = vmul.f32 %v989, %v778
      %v1022 = vmul.f32 %v990, %v780
      %v1023 = vmul.f32 %v991, %v782
      %v1024 = vmul.f32 %v992, %v784
      %v1025 = vmul.f32 %v993, %v786
      %v1026 = vmul.f32 %v994, %v788
      %v1027 = vmul.f32 %v995, %v790
      %v1028 = vmul.f32 %v996, %v792
      %v1029 = vmul.f32 %v997, %v794
      %v1030 = vmul.f32 %v998, %v796
      %v1031 = vmul.f32 %v999, %v798
      %v1032 = vmul.f32 %v1000, %v800
      %v1033 = vmul.f32 %v1001, %v802
      %v1034 = vmul.f32 %v1002, %v804
      %v1035 = vmul.f32 %v1003, %v806
      %v1036 = vmul.f32 %v1004, %v808
      %v1037 = vmul.f32 %v1005, %v810
      %v1038 = vmul.f32 %v1006, %v812
      %v1039 = vmul.f32 %v1007, %v814
      %v1040 = vmul.f32 %v1008, %v816
      %v1041 = vadd.f32 %v1009, 0.2548296
      %v1042 = vadd.f32 %v1010, 0.2548296
      %v1043 = vadd.f32 %v1011, 0.2548296
      %v1044 = vadd.f32 %v1012, 0.2548296
      %v1045 = vadd.f32 %v1013, 0.2548296
      %v1046 = vadd.f32 %v1014, 0.2548296
      %v1047 = vadd.f32 %v1015, 0.2548296
      %v1048 = vadd.f32 %v1016, 0.2548296
      %v1049 = vadd.f32 %v1017, 0.2548296
      %v1050 = vadd.f32 %v1018, 0.2548296
      %v1051 = vadd.f32 %v1019, 0.2548296
      %v1052 = vadd.f32 %v1020, 0.2548296
      %v1053 = vadd.f32 %v1021, 0.2548296
      %v1054 = vadd.f32 %v1022, 0.2548296
      %v1055 = vadd.f32 %v1023, 0.2548296
      %v1056 = vadd.f32 %v1024, 0.2548296
      %v1057 = vadd.f32 %v1025, 0.2548296
      %v1058 = vadd.f32 %v1026, 0.2548296
      %v1059 = vadd.f32 %v1027, 0.2548296
      %v1060 = vadd.f32 %v1028, 0.2548296
      %v1061 = vadd.f32 %v1029, 0.2548296
      %v1062 = vadd.f32 %v1030, 0.2548296
      %v1063 = vadd.f32 %v1031, 0.2548296
      %v1064 = vadd.f32 %v1032, 0.2548296
      %v1065 = vadd.f32 %v1033, 0.2548296
      %v1066 = vadd.f32 %v1034, 0.2548296
      %v1067 = vadd.f32 %v1035, 0.2548296
      %v1068 = vadd.f32 %v1036, 0.2548296
      %v1069 = vadd.f32 %v1037, 0.2548296
      %v1070 = vadd.f32 %v1038, 0.2548296
      %v1071 = vadd.f32 %v1039, 0.2548296
      %v1072 = vadd.f32 %v1040, 0.2548296
      %v1073 = vmul.f32 %v1041, %v754
      %v1074 = vmul.f32 %v1042, %v756
      %v1075 = vmul.f32 %v1043, %v758
      %v1076 = vmul.f32 %v1044, %v760
      %v1077 = vmul.f32 %v1045, %v762
      %v1078 = vmul.f32 %v1046, %v764
      %v1079 = vmul.f32 %v1047, %v766
      %v1080 = vmul.f32 %v1048, %v768
      %v1081 = vmul.f32 %v1049, %v770
      %v1082 = vmul.f32 %v1050, %v772
      %v1083 = vmul.f32 %v1051, %v774
      %v1084 = vmul.f32 %v1052, %v776
      %v1085 = vmul.f32 %v1053, %v778
      %v1086 = vmul.f32 %v1054, %v780
      %v1087 = vmul.f32 %v1055, %v782
      %v1088 = vmul.f32 %v1056, %v784
      %v1089 = vmul.f32 %v1057, %v786
      %v1090 = vmul.f32 %v1058, %v788
      %v1091 = vmul.f32 %v1059, %v790
      %v1092 = vmul.f32 %v1060, %v792
      %v1093 = vmul.f32 %v1061, %v794
      %v1094 = vmul.f32 %v1062, %v796
      %v1095 = vmul.f32 %v1063, %v798
      %v1096 = vmul.f32 %v1064, %v800
      %v1097 = vmul.f32 %v1065, %v802
      %v1098 = vmul.f32 %v1066, %v804
      %v1099 = vmul.f32 %v1067, %v806
      %v1100 = vmul.f32 %v1068, %v808
      %v1101 = vmul.f32 %v1069, %v810
      %v1102 = vmul.f32 %v1070, %v812
      %v1103 = vmul.f32 %v1071, %v814
      %v1104 = vmul.f32 %v1072, %v816
      %v1105 = vsub.f32 0.0, %v657
      %v1106 = vsub.f32 0.0, %v658
      %v1107 = vsub.f32 0.0, %v659
      %v1108 = vsub.f32 0.0, %v660
      %v1109 = vsub.f32 0.0, %v661
      %v1110 = vsub.f32 0.0, %v662
      %v1111 = vsub.f32 0.0, %v663
      %v1112 = vsub.f32 0.0, %v664
      %v1113 = vsub.f32 0.0, %v665
      %v1114 = vsub.f32 0.0, %v666
      %v1115 = vsub.f32 0.0, %v667
      %v1116 = vsub.f32 0.0, %v668
      %v1117 = vsub.f32 0.0, %v669
      %v1118 = vsub.f32 0.0, %v670
      %v1119 = vsub.f32 0.0, %v671
      %v1120 = vsub.f32 0.0, %v672
      %v1121 = vsub.f32 0.0, %v673
      %v1122 = vsub.f32 0.0, %v674
      %v1123 = vsub.f32 0.0, %v675
      %v1124 = vsub.f32 0.0, %v676
      %v1125 = vsub.f32 0.0, %v677
      %v1126 = vsub.f32 0.0, %v678
      %v1127 = vsub.f32 0.0, %v679
      %v1128 = vsub.f32 0.0, %v680
      %v1129 = vsub.f32 0.0, %v681
      %v1130 = vsub.f32 0.0, %v682
      %v1131 = vsub.f32 0.0, %v683
      %v1132 = vsub.f32 0.0, %v684
      %v1133 = vsub.f32 0.0, %v685
      %v1134 = vsub.f32 0.0, %v686
      %v1135 = vsub.f32 0.0, %v687
      %v1136 = vsub.f32 0.0, %v688
      %v1137 = vmul.f32 %v1105, %v657
      %v1138 = vmul.f32 %v1106, %v658
      %v1139 = vmul.f32 %v1107, %v659
      %v1140 = vmul.f32 %v1108, %v660
      %v1141 = vmul.f32 %v1109, %v661
      %v1142 = vmul.f32 %v1110, %v662
      %v1143 = vmul.f32 %v1111, %v663
      %v1144 = vmul.f32 %v1112, %v664
      %v1145 = vmul.f32 %v1113, %v665
      %v1146 = vmul.f32 %v1114, %v666
      %v1147 = vmul.f32 %v1115, %v667
      %v1148 = vmul.f32 %v1116, %v668
      %v1149 = vmul.f32 %v1117, %v669
      %v1150 = vmul.f32 %v1118, %v670
      %v1151 = vmul.f32 %v1119, %v671
      %v1152 = vmul.f32 %v1120, %v672
      %v1153 = vmul.f32 %v1121, %v673
      %v1154 = vmul.f32 %v1122, %v674
      %v1155 = vmul.f32 %v1123, %v675
      %v1156 = vmul.f32 %v1124, %v676
      %v1157 = vmul.f32 %v1125, %v677
      %v1158 = vmul.f32 %v1126, %v678
      %v1159 = vmul.f32 %v1127, %v679
      %v1160 = vmul.f32 %v1128, %v680
      %v1161 = vmul.f32 %v1129, %v681
      %v1162 = vmul.f32 %v1130, %v682
      %v1163 = vmul.f32 %v1131, %v683
      %v1164 = vmul.f32 %v1132, %v684
      %v1165 = vmul.f32 %v1133, %v685
      %v1166 = vmul.f32 %v1134, %v686
      %v1167 = vmul.f32 %v1135, %v687
      %v1168 = vmul.f32 %v1136, %v688
      %v1169 = vmul.f32 %v1137, 1.442695
      %v1170 = vpow.pop %v1169
      %v1171 = vmul.f32 %v1138, 1.442695
      %v1172 = vpow.pop %v1171
      %v1173 = vmul.f32 %v1139, 1.442695
      %v1174 = vpow.pop %v1173
      %v1175 = vmul.f32 %v1140, 1.442695
      %v1176 = vpow.pop %v1175
      %v1177 = vmul.f32 %v1141, 1.442695
      %v1178 = vpow.pop %v1177
      %v1179 = vmul.f32 %v1142, 1.442695
      %v1180 = vpow.pop %v1179
      %v1181 = vmul.f32 %v1143, 1.442695
      %v1182 = vpow.pop %v1181
      %v1183 = vmul.f32 %v1144, 1.442695
      %v1184 = vpow.pop %v1183
      %v1185 = vmul.f32 %v1145, 1.442695
      %v1186 = vpow.pop %v1185
      %v1187 = vmul.f32 %v1146, 1.442695
      %v1188 = vpow.pop %v1187
      %v1189 = vmul.f32 %v1147, 1.442695
      %v1190 = vpow.pop %v1189
      %v1191 = vmul.f32 %v1148, 1.442695
      %v1192 = vpow.pop %v1191
      %v1193 = vmul.f32 %v1149, 1.442695
      %v1194 = vpow.pop %v1193
      %v1195 = vmul.f32 %v1150, 1.442695
      %v1196 = vpow.pop %v1195
      %v1197 = vmul.f32 %v1151, 1.442695
      %v1198 = vpow.pop %v1197
      %v1199 = vmul.f32 %v1152, 1.442695
      %v1200 = vpow.pop %v1199
      %v1201 = vmul.f32 %v1153, 1.442695
      %v1202 = vpow.pop %v1201
      %v1203 = vmul.f32 %v1154, 1.442695
      %v1204 = vpow.pop %v1203
      %v1205 = vmul.f32 %v1155, 1.442695
      %v1206 = vpow.pop %v1205
      %v1207 = vmul.f32 %v1156, 1.442695
      %v1208 = vpow.pop %v1207
      %v1209 = vmul.f32 %v1157, 1.442695
      %v1210 = vpow.pop %v1209
      %v1211 = vmul.f32 %v1158, 1.442695
      %v1212 = vpow.pop %v1211
      %v1213 = vmul.f32 %v1159, 1.442695
      %v1214 = vpow.pop %v1213
      %v1215 = vmul.f32 %v1160, 1.442695
      %v1216 = vpow.pop %v1215
      %v1217 = vmul.f32 %v1161, 1.442695
      %v1218 = vpow.pop %v1217
      %v1219 = vmul.f32 %v1162, 1.442695
      %v1220 = vpow.pop %v1219
      %v1221 = vmul.f32 %v1163, 1.442695
      %v1222 = vpow.pop %v1221
      %v1223 = vmul.f32 %v1164, 1.442695
      %v1224 = vpow.pop %v1223
      %v1225 = vmul.f32 %v1165, 1.442695
      %v1226 = vpow.pop %v1225
      %v1227 = vmul.f32 %v1166, 1.442695
      %v1228 = vpow.pop %v1227
      %v1229 = vmul.f32 %v1167, 1.442695
      %v1230 = vpow.pop %v1229
      %v1231 = vmul.f32 %v1168, 1.442695
      %v1232 = vpow.pop %v1231
      %v1233 = vmul.f32 %v1073, %v1170
      %v1234 = vmul.f32 %v1074, %v1172
      %v1235 = vmul.f32 %v1075, %v1174
      %v1236 = vmul.f32 %v1076, %v1176
      %v1237 = vmul.f32 %v1077, %v1178
      %v1238 = vmul.f32 %v1078, %v1180
      %v1239 = vmul.f32 %v1079, %v1182
      %v1240 = vmul.f32 %v1080, %v1184
      %v1241 = vmul.f32 %v1081, %v1186
      %v1242 = vmul.f32 %v1082, %v1188
      %v1243 = vmul.f32 %v1083, %v1190
      %v1244 = vmul.f32 %v1084, %v1192
      %v1245 = vmul.f32 %v1085, %v1194
      %v1246 = vmul.f32 %v1086, %v1196
      %v1247 = vmul.f32 %v1087, %v1198
      %v1248 = vmul.f32 %v1088, %v1200
      %v1249 = vmul.f32 %v1089, %v1202
      %v1250 = vmul.f32 %v1090, %v1204
      %v1251 = vmul.f32 %v1091, %v1206
      %v1252 = vmul.f32 %v1092, %v1208
      %v1253 = vmul.f32 %v1093, %v1210
      %v1254 = vmul.f32 %v1094, %v1212
      %v1255 = vmul.f32 %v1095, %v1214
      %v1256 = vmul.f32 %v1096, %v1216
      %v1257 = vmul.f32 %v1097, %v1218
      %v1258 = vmul.f32 %v1098, %v1220
      %v1259 = vmul.f32 %v1099, %v1222
      %v1260 = vmul.f32 %v1100, %v1224
      %v1261 = vmul.f32 %v1101, %v1226
      %v1262 = vmul.f32 %v1102, %v1228
      %v1263 = vmul.f32 %v1103, %v1230
      %v1264 = vmul.f32 %v1104, %v1232
      %v1265 = vsub.f32 1.0, %v1233
      %v1266 = vsub.f32 1.0, %v1234
      %v1267 = vsub.f32 1.0, %v1235
      %v1268 = vsub.f32 1.0, %v1236
      %v1269 = vsub.f32 1.0, %v1237
      %v1270 = vsub.f32 1.0, %v1238
      %v1271 = vsub.f32 1.0, %v1239
      %v1272 = vsub.f32 1.0, %v1240
      %v1273 = vsub.f32 1.0, %v1241
      %v1274 = vsub.f32 1.0, %v1242
      %v1275 = vsub.f32 1.0, %v1243
      %v1276 = vsub.f32 1.0, %v1244
      %v1277 = vsub.f32 1.0, %v1245
      %v1278 = vsub.f32 1.0, %v1246
      %v1279 = vsub.f32 1.0, %v1247
      %v1280 = vsub.f32 1.0, %v1248
      %v1281 = vsub.f32 1.0, %v1249
      %v1282 = vsub.f32 1.0, %v1250
      %v1283 = vsub.f32 1.0, %v1251
      %v1284 = vsub.f32 1.0, %v1252
      %v1285 = vsub.f32 1.0, %v1253
      %v1286 = vsub.f32 1.0, %v1254
      %v1287 = vsub.f32 1.0, %v1255
      %v1288 = vsub.f32 1.0, %v1256
      %v1289 = vsub.f32 1.0, %v1257
      %v1290 = vsub.f32 1.0, %v1258
      %v1291 = vsub.f32 1.0, %v1259
      %v1292 = vsub.f32 1.0, %v1260
      %v1293 = vsub.f32 1.0, %v1261
      %v1294 = vsub.f32 1.0, %v1262
      %v1295 = vsub.f32 1.0, %v1263
      %v1296 = vsub.f32 1.0, %v1264
      %vm1297 = vcmp.ge.f32.partialorder %v625, 0.0
      %vm1298 = vcmp.ge.f32.partialorder %v626, 0.0
      %vm1299 = vcmp.ge.f32.partialorder %v627, 0.0
      %vm1300 = vcmp.ge.f32.partialorder %v628, 0.0
      %vm1301 = vcmp.ge.f32.partialorder %v629, 0.0
      %vm1302 = vcmp.ge.f32.partialorder %v630, 0.0
      %vm1303 = vcmp.ge.f32.partialorder %v631, 0.0
      %vm1304 = vcmp.ge.f32.partialorder %v632, 0.0
      %vm1305 = vcmp.ge.f32.partialorder %v633, 0.0
      %vm1306 = vcmp.ge.f32.partialorder %v634, 0.0
      %vm1307 = vcmp.ge.f32.partialorder %v635, 0.0
      %vm1308 = vcmp.ge.f32.partialorder %v636, 0.0
      %vm1309 = vcmp.ge.f32.partialorder %v637, 0.0
      %vm1310 = vcmp.ge.f32.partialorder %v638, 0.0
      %vm1311 = vcmp.ge.f32.partialorder %v639, 0.0
      %vm1312 = vcmp.ge.f32.partialorder %v640, 0.0
      %vm1313 = vcmp.ge.f32.partialorder %v641, 0.0
      %vm1314 = vcmp.ge.f32.partialorder %v642, 0.0
      %vm1315 = vcmp.ge.f32.partialorder %v643, 0.0
      %vm1316 = vcmp.ge.f32.partialorder %v644, 0.0
      %vm1317 = vcmp.ge.f32.partialorder %v645, 0.0
      %vm1318 = vcmp.ge.f32.partialorder %v646, 0.0
      %vm1319 = vcmp.ge.f32.partialorder %v647, 0.0
      %vm1320 = vcmp.ge.f32.partialorder %v648, 0.0
      %vm1321 = vcmp.ge.f32.partialorder %v649, 0.0
      %vm1322 = vcmp.ge.f32.partialorder %v650, 0.0
      %vm1323 = vcmp.ge.f32.partialorder %v651, 0.0
      %vm1324 = vcmp.ge.f32.partialorder %v652, 0.0
      %vm1325 = vcmp.ge.f32.partialorder %v653, 0.0
      %vm1326 = vcmp.ge.f32.partialorder %v654, 0.0
      %vm1327 = vcmp.ge.f32.partialorder %v655, 0.0
      %vm1328 = vcmp.ge.f32.partialorder %v656, 0.0
      %v1329 = vsub.f32 0.0, %v1265
      %v1330 = vsub.f32 0.0, %v1266
      %v1331 = vsub.f32 0.0, %v1267
      %v1332 = vsub.f32 0.0, %v1268
      %v1333 = vsub.f32 0.0, %v1269
      %v1334 = vsub.f32 0.0, %v1270
      %v1335 = vsub.f32 0.0, %v1271
      %v1336 = vsub.f32 0.0, %v1272
      %v1337 = vsub.f32 0.0, %v1273
      %v1338 = vsub.f32 0.0, %v1274
      %v1339 = vsub.f32 0.0, %v1275
      %v1340 = vsub.f32 0.0, %v1276
      %v1341 = vsub.f32 0.0, %v1277
      %v1342 = vsub.f32 0.0, %v1278
      %v1343 = vsub.f32 0.0, %v1279
      %v1344 = vsub.f32 0.0, %v1280
      %v1345 = vsub.f32 0.0, %v1281
      %v1346 = vsub.f32 0.0, %v1282
      %v1347 = vsub.f32 0.0, %v1283
      %v1348 = vsub.f32 0.0, %v1284
      %v1349 = vsub.f32 0.0, %v1285
      %v1350 = vsub.f32 0.0, %v1286
      %v1351 = vsub.f32 0.0, %v1287
      %v1352 = vsub.f32 0.0, %v1288
      %v1353 = vsub.f32 0.0, %v1289
      %v1354 = vsub.f32 0.0, %v1290
      %v1355 = vsub.f32 0.0, %v1291
      %v1356 = vsub.f32 0.0, %v1292
      %v1357 = vsub.f32 0.0, %v1293
      %v1358 = vsub.f32 0.0, %v1294
      %v1359 = vsub.f32 0.0, %v1295
      %v1360 = vsub.f32 0.0, %v1296
      %v1361 = vsel %vm1297, %v1265, %v1329
      %v1362 = vsel %vm1298, %v1266, %v1330
      %v1363 = vsel %vm1299, %v1267, %v1331
      %v1364 = vsel %vm1300, %v1268, %v1332
      %v1365 = vsel %vm1301, %v1269, %v1333
      %v1366 = vsel %vm1302, %v1270, %v1334
      %v1367 = vsel %vm1303, %v1271, %v1335
      %v1368 = vsel %vm1304, %v1272, %v1336
      %v1369 = vsel %vm1305, %v1273, %v1337
      %v1370 = vsel %vm1306, %v1274, %v1338
      %v1371 = vsel %vm1307, %v1275, %v1339
      %v1372 = vsel %vm1308, %v1276, %v1340
      %v1373 = vsel %vm1309, %v1277, %v1341
      %v1374 = vsel %vm1310, %v1278, %v1342
      %v1375 = vsel %vm1311, %v1279, %v1343
      %v1376 = vsel %vm1312, %v1280, %v1344
      %v1377 = vsel %vm1313, %v1281, %v1345
      %v1378 = vsel %vm1314, %v1282, %v1346
      %v1379 = vsel %vm1315, %v1283, %v1347
      %v1380 = vsel %vm1316, %v1284, %v1348
      %v1381 = vsel %vm1317, %v1285, %v1349
      %v1382 = vsel %vm1318, %v1286, %v1350
      %v1383 = vsel %vm1319, %v1287, %v1351
      %v1384 = vsel %vm1320, %v1288, %v1352
      %v1385 = vsel %vm1321, %v1289, %v1353
      %v1386 = vsel %vm1322, %v1290, %v1354
      %v1387 = vsel %vm1323, %v1291, %v1355
      %v1388 = vsel %vm1324, %v1292, %v1356
      %v1389 = vsel %vm1325, %v1293, %v1357
      %v1390 = vsel %vm1326, %v1294, %v1358
      %v1391 = vsel %vm1327, %v1295, %v1359
      %v1392 = vsel %vm1328, %v1296, %v1360
      %v1393 = vadd.f32 %v1361, 1.0
      %v1394 = vadd.f32 %v1362, 1.0
      %v1395 = vadd.f32 %v1363, 1.0
      %v1396 = vadd.f32 %v1364, 1.0
      %v1397 = vadd.f32 %v1365, 1.0
      %v1398 = vadd.f32 %v1366, 1.0
      %v1399 = vadd.f32 %v1367, 1.0
      %v1400 = vadd.f32 %v1368, 1.0
      %v1401 = vadd.f32 %v1369, 1.0
      %v1402 = vadd.f32 %v1370, 1.0
      %v1403 = vadd.f32 %v1371, 1.0
      %v1404 = vadd.f32 %v1372, 1.0
      %v1405 = vadd.f32 %v1373, 1.0
      %v1406 = vadd.f32 %v1374, 1.0
      %v1407 = vadd.f32 %v1375, 1.0
      %v1408 = vadd.f32 %v1376, 1.0
      %v1409 = vadd.f32 %v1377, 1.0
      %v1410 = vadd.f32 %v1378, 1.0
      %v1411 = vadd.f32 %v1379, 1.0
      %v1412 = vadd.f32 %v1380, 1.0
      %v1413 = vadd.f32 %v1381, 1.0
      %v1414 = vadd.f32 %v1382, 1.0
      %v1415 = vadd.f32 %v1383, 1.0
      %v1416 = vadd.f32 %v1384, 1.0
      %v1417 = vadd.f32 %v1385, 1.0
      %v1418 = vadd.f32 %v1386, 1.0
      %v1419 = vadd.f32 %v1387, 1.0
      %v1420 = vadd.f32 %v1388, 1.0
      %v1421 = vadd.f32 %v1389, 1.0
      %v1422 = vadd.f32 %v1390, 1.0
      %v1423 = vadd.f32 %v1391, 1.0
      %v1424 = vadd.f32 %v1392, 1.0
      %v1425 = vmul.f32 %v593, %v1393
      %v1426 = vmul.f32 %v594, %v1394
      %v1427 = vmul.f32 %v595, %v1395
      %v1428 = vmul.f32 %v596, %v1396
      %v1429 = vmul.f32 %v597, %v1397
      %v1430 = vmul.f32 %v598, %v1398
      %v1431 = vmul.f32 %v599, %v1399
      %v1432 = vmul.f32 %v600, %v1400
      %v1433 = vmul.f32 %v601, %v1401
      %v1434 = vmul.f32 %v602, %v1402
      %v1435 = vmul.f32 %v603, %v1403
      %v1436 = vmul.f32 %v604, %v1404
      %v1437 = vmul.f32 %v605, %v1405
      %v1438 = vmul.f32 %v606, %v1406
      %v1439 = vmul.f32 %v607, %v1407
      %v1440 = vmul.f32 %v608, %v1408
      %v1441 = vmul.f32 %v609, %v1409
      %v1442 = vmul.f32 %v610, %v1410
      %v1443 = vmul.f32 %v611, %v1411
      %v1444 = vmul.f32 %v612, %v1412
      %v1445 = vmul.f32 %v613, %v1413
      %v1446 = vmul.f32 %v614, %v1414
      %v1447 = vmul.f32 %v615, %v1415
      %v1448 = vmul.f32 %v616, %v1416
      %v1449 = vmul.f32 %v617, %v1417
      %v1450 = vmul.f32 %v618, %v1418
      %v1451 = vmul.f32 %v619, %v1419
      %v1452 = vmul.f32 %v620, %v1420
      %v1453 = vmul.f32 %v621, %v1421
      %v1454 = vmul.f32 %v622, %v1422
      %v1455 = vmul.f32 %v623, %v1423
      %v1456 = vmul.f32 %v624, %v1424
      %v1457 = vld [vmem:[%s3] sm:$0xff]
      %v1458 = vld [vmem:[%s3 + $0x8] sm:$0xff]
      %v1459 = vld [vmem:[%s3 + $0x10] sm:$0xff]
      %v1460 = vld [vmem:[%s3 + $0x18] sm:$0xff]
      %v1461 = vld [vmem:[%s3 + $0x20] sm:$0xff]
      %v1462 = vld [vmem:[%s3 + $0x28] sm:$0xff]
      %v1463 = vld [vmem:[%s3 + $0x30] sm:$0xff]
      %v1464 = vld [vmem:[%s3 + $0x38] sm:$0xff]
      %v1465 = vld [vmem:[%s3 + $0x40] sm:$0xff]
      %v1466 = vld [vmem:[%s3 + $0x48] sm:$0xff]
      %v1467 = vld [vmem:[%s3 + $0x50] sm:$0xff]
      %v1468 = vld [vmem:[%s3 + $0x58] sm:$0xff]
      %v1469 = vld [vmem:[%s3 + $0x60] sm:$0xff]
      %v1470 = vld [vmem:[%s3 + $0x68] sm:$0xff]
      %v1471 = vld [vmem:[%s3 + $0x70] sm:$0xff]
      %v1472 = vld [vmem:[%s3 + $0x78] sm:$0xff]
      %v1473 = vld [vmem:[%s4] sm:$0x1]
      %v1475 = vlaneseq
      %v1476 = vshrl.u32 %v1475, 7
      %v1477 = vsub.s32 0, %v1476
      %v1478 = vrot.slane %v1473, %v1477
      %1480 = vmatprep.subr.mxu0 0.0
      %1481 = vmatpush1.msra.mxu0 %v1457
      %1482 = vmatprep.subr.mxu0 0.0
      %1483 = vmatpush1.msra.mxu0 %v1458
      %1484 = vmatprep.subr.mxu0 0.0
      %1485 = vmatpush1.msra.mxu0 %v1459
      %1486 = vmatprep.subr.mxu0 0.0
      %1487 = vmatpush1.msra.mxu0 %v1460
      %1488 = vmatprep.subr.mxu0 0.0
      %1489 = vmatpush1.msra.mxu0 %v1461
      %1490 = vmatprep.subr.mxu0 0.0
      %1491 = vmatpush1.msra.mxu0 %v1462
      %1492 = vmatprep.subr.mxu0 0.0
      %1493 = vmatpush1.msra.mxu0 %v1463
      %1494 = vmatprep.subr.mxu0 0.0
      %1495 = vmatpush1.msra.mxu0 %v1464
      %1496 = vmatprep.subr.mxu0 0.0
      %1497 = vmatpush1.msra.mxu0 %v1465
      %1498 = vmatprep.subr.mxu0 0.0
      %1499 = vmatpush1.msra.mxu0 %v1466
      %1500 = vmatprep.subr.mxu0 0.0
      %1501 = vmatpush1.msra.mxu0 %v1467
      %1502 = vmatprep.subr.mxu0 0.0
      %1503 = vmatpush1.msra.mxu0 %v1468
      %1504 = vmatprep.subr.mxu0 0.0
      %1505 = vmatpush1.msra.mxu0 %v1469
      %1506 = vmatprep.subr.mxu0 0.0
      %1507 = vmatpush1.msra.mxu0 %v1470
      %1508 = vmatprep.subr.mxu0 0.0
      %1509 = vmatpush1.msra.mxu0 %v1471
      %1510 = vmatprep.subr.mxu0 0.0
      %1511 = vmatpush1.msra.mxu0 %v1472
      %1512 = vmatprep.subr.mxu0 0.0
      %1513 = vmatpush1.msra.mxu0 0.0
      %1514 = vmatprep.subr.mxu0 0.0
      %1515 = vmatpush1.msra.mxu0 0.0
      %1516 = vmatprep.subr.mxu0 0.0
      %1517 = vmatpush1.msra.mxu0 0.0
      %1518 = vmatprep.subr.mxu0 0.0
      %1519 = vmatpush1.msra.mxu0 0.0
      %1520 = vmatprep.subr.mxu0 0.0
      %1521 = vmatpush1.msra.mxu0 0.0
      %1522 = vmatprep.subr.mxu0 0.0
      %1523 = vmatpush1.msra.mxu0 0.0
      %1524 = vmatprep.subr.mxu0 0.0
      %1525 = vmatpush1.msra.mxu0 0.0
      %1526 = vmatprep.subr.mxu0 0.0
      %1527 = vmatpush1.msra.mxu0 0.0
      %1528 = vmatprep.subr.mxu0 0.0
      %1529 = vmatpush1.msra.mxu0 0.0
      %1530 = vmatprep.subr.mxu0 0.0
      %1531 = vmatpush1.msra.mxu0 0.0
      %1532 = vmatprep.subr.mxu0 0.0
      %1533 = vmatpush1.msra.mxu0 0.0
      %1534 = vmatprep.subr.mxu0 0.0
      %1535 = vmatpush1.msra.mxu0 0.0
      %1536 = vmatprep.subr.mxu0 0.0
      %1537 = vmatpush1.msra.mxu0 0.0
      %1538 = vmatprep.subr.mxu0 0.0
      %1539 = vmatpush1.msra.mxu0 0.0
      %1540 = vmatprep.subr.mxu0 0.0
      %1541 = vmatpush1.msra.mxu0 0.0
      %1542 = vmatprep.subr.mxu0 0.0
      %1543 = vmatpush1.msra.mxu0 0.0
      %1544 = vmatprep.mubr.f32.mxu0 0.0
      %1545 = vmatmul.mubr.f32.gmra.mrb[0].mxu0 %v1425
      %v1546 = vpop.f32.mrb[0].mxu0
      %v1547 = vadd.f32 %v1478, %v1546
      %v1548 = vpop.f32.mrb[0].mxu0
      %1549 = vmatprep.mubr.f32.mxu0 0.0
      %1550 = vmatmul.mubr.f32.gmra.mrb[0].mxu0 %v1426
      %v1551 = vpop.f32.mrb[0].mxu0
      %v1552 = vadd.f32 %v1478, %v1551
      %v1553 = vpop.f32.mrb[0].mxu0
      %1554 = vmatprep.mubr.f32.mxu0 0.0
      %1555 = vmatmul.mubr.f32.gmra.mrb[0].mxu0 %v1427
      %v1556 = vpop.f32.mrb[0].mxu0
      %v1557 = vadd.f32 %v1478, %v1556
      %v1558 = vpop.f32.mrb[0].mxu0
      %1559 = vmatprep.mubr.f32.mxu0 0.0
      %1560 = vmatmul.mubr.f32.gmra.mrb[0].mxu0 %v1428
      %v1561 = vpop.f32.mrb[0].mxu0
      %v1562 = vadd.f32 %v1478, %v1561
      %v1563 = vpop.f32.mrb[0].mxu0
      %1564 = vmatprep.mubr.f32.mxu0 0.0
      %1565 = vmatmul.mubr.f32.gmra.mrb[0].mxu0 %v1429
      %v1566 = vpop.f32.mrb[0].mxu0
      %v1567 = vadd.f32 %v1478, %v1566
      %v1568 = vpop.f32.mrb[0].mxu0
      %1569 = vmatprep.mubr.f32.mxu0 0.0
      %1570 = vmatmul.mubr.f32.gmra.mrb[0].mxu0 %v1430
      %v1571 = vpop.f32.mrb[0].mxu0
      %v1572 = vadd.f32 %v1478, %v1571
      %v1573 = vpop.f32.mrb[0].mxu0
      %1574 = vmatprep.mubr.f32.mxu0 0.0
      %1575 = vmatmul.mubr.f32.gmra.mrb[0].mxu0 %v1431
      %v1576 = vpop.f32.mrb[0].mxu0
      %v1577 = vadd.f32 %v1478, %v1576
      %v1578 = vpop.f32.mrb[0].mxu0
      %1579 = vmatprep.mubr.f32.mxu0 0.0
      %1580 = vmatmul.mubr.f32.gmra.mrb[0].mxu0 %v1432
      %v1581 = vpop.f32.mrb[0].mxu0
      %v1582 = vadd.f32 %v1478, %v1581
      %v1583 = vpop.f32.mrb[0].mxu0
      %1584 = vmatprep.mubr.f32.mxu0 0.0
      %1585 = vmatmul.mubr.f32.gmra.mrb[0].mxu0 %v1433
      %v1586 = vpop.f32.mrb[0].mxu0
      %v1587 = vadd.f32 %v1478, %v1586
      %v1588 = vpop.f32.mrb[0].mxu0
      %1589 = vmatprep.mubr.f32.mxu0 0.0
      %1590 = vmatmul.mubr.f32.gmra.mrb[0].mxu0 %v1434
      %v1591 = vpop.f32.mrb[0].mxu0
      %v1592 = vadd.f32 %v1478, %v1591
      %v1593 = vpop.f32.mrb[0].mxu0
      %1594 = vmatprep.mubr.f32.mxu0 0.0
      %1595 = vmatmul.mubr.f32.gmra.mrb[0].mxu0 %v1435
      %v1596 = vpop.f32.mrb[0].mxu0
      %v1597 = vadd.f32 %v1478, %v1596
      %v1598 = vpop.f32.mrb[0].mxu0
      %1599 = vmatprep.mubr.f32.mxu0 0.0
      %1600 = vmatmul.mubr.f32.gmra.mrb[0].mxu0 %v1436
      %v1601 = vpop.f32.mrb[0].mxu0
      %v1602 = vadd.f32 %v1478, %v1601
      %v1603 = vpop.f32.mrb[0].mxu0
      %1604 = vmatprep.mubr.f32.mxu0 0.0
      %1605 = vmatmul.mubr.f32.gmra.mrb[0].mxu0 %v1437
      %v1606 = vpop.f32.mrb[0].mxu0
      %v1607 = vadd.f32 %v1478, %v1606
      %v1608 = vpop.f32.mrb[0].mxu0
      %1609 = vmatprep.mubr.f32.mxu0 0.0
      %1610 = vmatmul.mubr.f32.gmra.mrb[0].mxu0 %v1438
      %v1611 = vpop.f32.mrb[0].mxu0
      %v1612 = vadd.f32 %v1478, %v1611
      %v1613 = vpop.f32.mrb[0].mxu0
      %1614 = vmatprep.mubr.f32.mxu0 0.0
      %1615 = vmatmul.mubr.f32.gmra.mrb[0].mxu0 %v1439
      %v1616 = vpop.f32.mrb[0].mxu0
      %v1617 = vadd.f32 %v1478, %v1616
      %v1618 = vpop.f32.mrb[0].mxu0
      %1619 = vmatprep.mubr.f32.mxu0 0.0
      %1620 = vmatmul.mubr.f32.gmra.mrb[0].mxu0 %v1440
      %v1621 = vpop.f32.mrb[0].mxu0
      %v1622 = vadd.f32 %v1478, %v1621
      %v1623 = vpop.f32.mrb[0].mxu0
      %1624 = vmatprep.mubr.f32.mxu0 0.0
      %1625 = vmatmul.mubr.f32.gmra.mrb[0].mxu0 %v1441
      %v1626 = vpop.f32.mrb[0].mxu0
      %v1627 = vadd.f32 %v1478, %v1626
      %v1628 = vpop.f32.mrb[0].mxu0
      %1629 = vmatprep.mubr.f32.mxu0 0.0
      %1630 = vmatmul.mubr.f32.gmra.mrb[0].mxu0 %v1442
      %v1631 = vpop.f32.mrb[0].mxu0
      %v1632 = vadd.f32 %v1478, %v1631
      %v1633 = vpop.f32.mrb[0].mxu0
      %1634 = vmatprep.mubr.f32.mxu0 0.0
      %1635 = vmatmul.mubr.f32.gmra.mrb[0].mxu0 %v1443
      %v1636 = vpop.f32.mrb[0].mxu0
      %v1637 = vadd.f32 %v1478, %v1636
      %v1638 = vpop.f32.mrb[0].mxu0
      %1639 = vmatprep.mubr.f32.mxu0 0.0
      %1640 = vmatmul.mubr.f32.gmra.mrb[0].mxu0 %v1444
      %v1641 = vpop.f32.mrb[0].mxu0
      %v1642 = vadd.f32 %v1478, %v1641
      %v1643 = vpop.f32.mrb[0].mxu0
      %1644 = vmatprep.mubr.f32.mxu0 0.0
      %1645 = vmatmul.mubr.f32.gmra.mrb[0].mxu0 %v1445
      %v1646 = vpop.f32.mrb[0].mxu0
      %v1647 = vadd.f32 %v1478, %v1646
      %v1648 = vpop.f32.mrb[0].mxu0
      %1649 = vmatprep.mubr.f32.mxu0 0.0
      %1650 = vmatmul.mubr.f32.gmra.mrb[0].mxu0 %v1446
      %v1651 = vpop.f32.mrb[0].mxu0
      %v1652 = vadd.f32 %v1478, %v1651
      %v1653 = vpop.f32.mrb[0].mxu0
      %1654 = vmatprep.mubr.f32.mxu0 0.0
      %1655 = vmatmul.mubr.f32.gmra.mrb[0].mxu0 %v1447
      %v1656 = vpop.f32.mrb[0].mxu0
      %v1657 = vadd.f32 %v1478, %v1656
      %v1658 = vpop.f32.mrb[0].mxu0
      %1659 = vmatprep.mubr.f32.mxu0 0.0
      %1660 = vmatmul.mubr.f32.gmra.mrb[0].mxu0 %v1448
      %v1661 = vpop.f32.mrb[0].mxu0
      %v1662 = vadd.f32 %v1478, %v1661
      %v1663 = vpop.f32.mrb[0].mxu0
      %1664 = vmatprep.mubr.f32.mxu0 0.0
      %1665 = vmatmul.mubr.f32.gmra.mrb[0].mxu0 %v1449
      %v1666 = vpop.f32.mrb[0].mxu0
      %v1667 = vadd.f32 %v1478, %v1666
      %v1668 = vpop.f32.mrb[0].mxu0
      %1669 = vmatprep.mubr.f32.mxu0 0.0
      %1670 = vmatmul.mubr.f32.gmra.mrb[0].mxu0 %v1450
      %v1671 = vpop.f32.mrb[0].mxu0
      %v1672 = vadd.f32 %v1478, %v1671
      %v1673 = vpop.f32.mrb[0].mxu0
      %1674 = vmatprep.mubr.f32.mxu0 0.0
      %1675 = vmatmul.mubr.f32.gmra.mrb[0].mxu0 %v1451
      %v1676 = vpop.f32.mrb[0].mxu0
      %v1677 = vadd.f32 %v1478, %v1676
      %v1678 = vpop.f32.mrb[0].mxu0
      %1679 = vmatprep.mubr.f32.mxu0 0.0
      %1680 = vmatmul.mubr.f32.gmra.mrb[0].mxu0 %v1452
      %v1681 = vpop.f32.mrb[0].mxu0
      %v1682 = vadd.f32 %v1478, %v1681
      %v1683 = vpop.f32.mrb[0].mxu0
      %1684 = vmatprep.mubr.f32.mxu0 0.0
      %1685 = vmatmul.mubr.f32.gmra.mrb[0].mxu0 %v1453
      %v1686 = vpop.f32.mrb[0].mxu0
      %v1687 = vadd.f32 %v1478, %v1686
      %v1688 = vpop.f32.mrb[0].mxu0
      %1689 = vmatprep.mubr.f32.mxu0 0.0
      %1690 = vmatmul.mubr.f32.gmra.mrb[0].mxu0 %v1454
      %v1691 = vpop.f32.mrb[0].mxu0
      %v1692 = vadd.f32 %v1478, %v1691
      %v1693 = vpop.f32.mrb[0].mxu0
      %1694 = vmatprep.mubr.f32.mxu0 0.0
      %1695 = vmatmul.mubr.f32.gmra.mrb[0].mxu0 %v1455
      %v1696 = vpop.f32.mrb[0].mxu0
      %v1697 = vadd.f32 %v1478, %v1696
      %v1698 = vpop.f32.mrb[0].mxu0
      %1699 = vmatprep.mubr.f32.mxu0 0.0
      %1700 = vmatmul.mubr.f32.gmra.mrb[0].mxu0 %v1456
      %v1701 = vpop.f32.mrb[0].mxu0
      %v1702 = vadd.f32 %v1478, %v1701
      %v1703 = vpop.f32.mrb[0].mxu0
      %1704 = vdwg.mxu0
      %1705 = vst.msk [vmem:[%s226] sm:$0xff] %vm271, %v1547
      %1706 = vst.msk [vmem:[%s226 + $0x8] sm:$0xff] %vm271, %v1552
      %1707 = vst.msk [vmem:[%s226 + $0x10] sm:$0xff] %vm271, %v1557
      %1708 = vst.msk [vmem:[%s226 + $0x18] sm:$0xff] %vm271, %v1562
      %1709 = vst.msk [vmem:[%s226 + $0x20] sm:$0xff] %vm271, %v1567
      %1710 = vst.msk [vmem:[%s226 + $0x28] sm:$0xff] %vm271, %v1572
      %1711 = vst.msk [vmem:[%s226 + $0x30] sm:$0xff] %vm271, %v1577
      %1712 = vst.msk [vmem:[%s226 + $0x38] sm:$0xff] %vm271, %v1582
      %1713 = vst.msk [vmem:[%s226 + $0x40] sm:$0xff] %vm271, %v1587
      %1714 = vst.msk [vmem:[%s226 + $0x48] sm:$0xff] %vm271, %v1592
      %1715 = vst.msk [vmem:[%s226 + $0x50] sm:$0xff] %vm271, %v1597
      %1716 = vst.msk [vmem:[%s226 + $0x58] sm:$0xff] %vm271, %v1602
      %1717 = vst.msk [vmem:[%s226 + $0x60] sm:$0xff] %vm271, %v1607
      %1718 = vst.msk [vmem:[%s226 + $0x68] sm:$0xff] %vm271, %v1612
      %1719 = vst.msk [vmem:[%s226 + $0x70] sm:$0xff] %vm271, %v1617
      %1720 = vst.msk [vmem:[%s226 + $0x78] sm:$0xff] %vm271, %v1622
      %1721 = vst.msk [vmem:[%s226 + $0x80] sm:$0xff] %vm271, %v1627
      %1722 = vst.msk [vmem:[%s226 + $0x88] sm:$0xff] %vm271, %v1632
      %1723 = vst.msk [vmem:[%s226 + $0x90] sm:$0xff] %vm271, %v1637
      %1724 = vst.msk [vmem:[%s226 + $0x98] sm:$0xff] %vm271, %v1642
      %1725 = vst.msk [vmem:[%s226 + $0xa0] sm:$0xff] %vm271, %v1647
      %1726 = vst.msk [vmem:[%s226 + $0xa8] sm:$0xff] %vm271, %v1652
      %1727 = vst.msk [vmem:[%s226 + $0xb0] sm:$0xff] %vm271, %v1657
      %1728 = vst.msk [vmem:[%s226 + $0xb8] sm:$0xff] %vm271, %v1662
      %1729 = vst.msk [vmem:[%s226 + $0xc0] sm:$0xff] %vm271, %v1667
      %1730 = vst.msk [vmem:[%s226 + $0xc8] sm:$0xff] %vm271, %v1672
      %1731 = vst.msk [vmem:[%s226 + $0xd0] sm:$0xff] %vm271, %v1677
      %1732 = vst.msk [vmem:[%s226 + $0xd8] sm:$0xff] %vm271, %v1682
      %1733 = vst.msk [vmem:[%s226 + $0xe0] sm:$0xff] %vm271, %v1687
      %1734 = vst.msk [vmem:[%s226 + $0xe8] sm:$0xff] %vm271, %v1692
      %1735 = vst.msk [vmem:[%s226 + $0xf0] sm:$0xff] %vm271, %v1697
      %1736 = vst.msk [vmem:[%s226 + $0xf8] sm:$0xff] %vm271, %v1702
      %s1737 = smul.u32 32, %s16
      %p1738 = scmp.lt.s32.totalorder %s1737, 63
      %s1739 = scalar_select %p1738, %s1737, 63
      %s1740 = smul.addr %s1739, 8
      %s1741 = scalar_lea.vmem %s5, %s1740
      // Predicated region
      $region41: #{tpu_custom_call.1} parent=39 // pred_check
        %p1742 = pneg %p144
      $region42: #{tpu_custom_call.1} parent=39 // pred_check_branch
        %1744 = sbr.rel (%p1742) target = $region44
      $region43: #{tpu_custom_call.1} parent=39 // pred_region
        %s1745 = smul.u32 32, %s16
      $region44: #{tpu_custom_call.1} parent=39 // pred_fallthru
        _
    $region40: #{tpu_custom_call.1} parent=5 // pred_fallthru
      _
    %p1746 = scmp.le.s32.totalorder 2, %s11
    // Predicated region
    $region45: #{tpu_custom_call.1} parent=5 // pred_check
      %p1747 = pneg %p1746
    $region46: #{tpu_custom_call.1} parent=5 // pred_check_branch
      %1749 = sbr.rel (%p1747) target = $region48
    $region47: #{tpu_custom_call.1} parent=5 // pred_region
      %s1750 = ssub.s32 %s11, 2
      // Predicated region
      $region49: #{tpu_custom_call.1} parent=47 // pred_check
        %p1751 = pneg %p150
      $region50: #{tpu_custom_call.1} parent=47 // pred_check_branch
        %1753 = sbr.rel (%p1751) target = $region52
      $region51: #{tpu_custom_call.1} parent=47 // pred_region
        %s1754 = smul.u32 32, %s17
        %p1755 = scmp.lt.s32.totalorder %s1754, 63
        %s1756 = scalar_select %p1755, %s1754, 63
        %s1757 = smul.addr %s1756, 8
        %s1758 = scalar_lea.vmem %s5, %s1757
      $region52: #{tpu_custom_call.1} parent=47 // pred_fallthru
        _
    $region48: #{tpu_custom_call.1} parent=5 // pred_fallthru
      _
  $region6: #{tpu_custom_call.1} parent=0 // loop_footer
    %s15 = sadd.s32 1, %s11
  $region7: #{tpu_custom_call.1} parent=0 // loop_footer_branch
    %10 = sbr.rel target = $region3
  $region8: #{tpu_custom_call.1} parent=0 // loop_exit
    _

</llo_original>
